<compile_context>
chip_gen: v7x
topology: tpu7x:2x2x1
jax: 0.10.0
libtpu: 0.0.40
codegen_flags: <defaults>
</compile_context>

<pallas_src>
import functools
import math

import jax
import jax.numpy as jnp
from jax.experimental import pallas as pl
from jax.experimental.pallas import tpu as pltpu

SQRT_HALF = math.sqrt(0.5)  # = self.scale in the PyTorch module
LANE = 128
# EUP approximate reciprocal for the softmax denominator (rows sum to ~1, not exactly 1).
APPROX_SOFTMAX_RECIPROCAL = True


def _round_up(x, m):
    return (x + m - 1) // m * m


def _pad_to(x, shape):
    pads = [(0, t - s) for s, t in zip(x.shape, shape)]
    if all(p == (0, 0) for p in pads):
        return x
    return jnp.pad(x, pads)


def _pad2(w, rows, cols):
    return jnp.pad(w, ((0, rows - w.shape[0]), (0, cols - w.shape[1])))


def _choose_block_b(B, T, target_rows=256):
    """Largest divisor Bb of B with Bb*T <= target MXU rows, preferring an even grid (v7x)."""
    divisors = [d for d in range(1, B + 1) if B % d == 0]
    fits = [d for d in divisors if d * T <= max(target_rows, T)]
    even = [d for d in fits if (B // d) % 2 == 0]
    pool = even if even else fits
    return max(pool)


# ---------------------------------------------------------------------------
# Fused decoder kernel: one grid step == Bb batch elements, all layers inside.
# ---------------------------------------------------------------------------
def _decoder_fused_kernel(emb_ref, encct_ref, encz_ref,
                          w_e2h_ref, b_e2h_ref,
                          w_conv_ref, b_conv_ref,
                          w_ah2e_ref, b_ah2e_ref,
                          w_ae2h_ref, b_ae2h_ref,
                          w_h2e_ref, b_h2e_ref,
                          w_fc_ref, b_fc_ref,
                          out_ref, attn_ref,
                          *, num_layers, kernel_size, src_len):
    Bb, T, EP = emb_ref.shape
    HP = w_e2h_ref.shape[1]
    Sp = encct_ref.shape[2]
    K = kernel_size
    R = Bb * T                                    # rows fed to every weight matmul
    f32 = jnp.float32
    cdt = w_e2h_ref.dtype                         # matmul operand dtype (bf16)
    scale = f32(SQRT_HALF)
    NEG = f32(-1e30)

    emb = emb_ref[...].reshape(R, EP)             # (R, EP) token+pos embed (dropout = identity), f32
    encc = encct_ref[...]                         # (Bb, EP, Sp) encoder_conved^T (bf16)
    encz = encz_ref[...]                          # (Bb, Sp, EP) encoder_combined (bf16)

    # emb2hid: all Bb*T rows through the MXU at once.
    x = jnp.dot(emb.astype(cdt), w_e2h_ref[...],
                preferred_element_type=f32) + b_e2h_ref[...]          # (R, HP)

    # Position of each flattened row within its length-T sequence: masks the causal roll
    # so shifted rows never leak across batch elements in the packed (Bb*T) axis.
    t_in_seq = jax.lax.broadcasted_iota(jnp.int32, (R, HP), 0) % T
    s_valid = jax.lax.broadcasted_iota(jnp.int32, (Bb, T, Sp), 2) < src_len

    attn = None
    for l in range(num_layers):
        # ---- causal Conv1d(H -> 2H) as K accumulated MXU matmuls (no im2col concat) ----
        conv = b_conv_ref[l]                                          # (1, 2*HP), broadcasts
        for k in range(K):
            s = K - 1 - k
            if s == 0:
                xk = x
            else:
                xk = jnp.where(t_in_seq >= s,
                               pltpu.roll(x, shift=s, axis=0), f32(0.0))
            conv = conv + jnp.dot(xk.astype(cdt), w_conv_ref[l, k],
                                  preferred_element_type=f32)         # (R, 2*HP)
        glu = conv[:, :HP] * jax.nn.sigmoid(conv[:, HP:])             # F.glu over channels, f32

        # ---- calc_attention ----
        conved_emb = jnp.dot(glu.astype(cdt), w_ah2e_ref[...],
                             preferred_element_type=f32) + b_ah2e_ref[...]   # (R, EP)
        combined = (conved_emb + emb) * scale
        energy = jnp.einsum("btd,bds->bts",
                            combined.reshape(Bb, T, EP).astype(cdt), encc,
                            preferred_element_type=f32)               # (Bb, T, Sp)
        energy = jnp.where(s_valid, energy, NEG)                      # mask padded source cols
        m = jnp.max(energy, axis=-1, keepdims=True)
        p = jnp.exp(energy - m)
        attn = p * pl.reciprocal(jnp.sum(p, axis=-1, keepdims=True),
                                 approx=APPROX_SOFTMAX_RECIPROCAL)    # (Bb, T, Sp), f32
        attended = jnp.einsum("bts,bse->bte", attn.astype(cdt), encz,
                              preferred_element_type=f32)             # (Bb, T, EP)
        attended_h = jnp.dot(attended.reshape(R, EP).astype(cdt), w_ae2h_ref[...],
                             preferred_element_type=f32) + b_ae2h_ref[...]   # (R, HP)
        # residual against this layer's conv input
        x = ((glu + attended_h) * scale + x) * scale

    # hid2emb -> fc (lane-dense, padded V)
    conved = jnp.dot(x.astype(cdt), w_h2e_ref[...],
                     preferred_element_type=f32) + b_h2e_ref[...]
    out = jnp.dot(conved.astype(cdt), w_fc_ref[...],
                  preferred_element_type=f32) + b_fc_ref[...]
    out_ref[...] = out.reshape(Bb, T, out_ref.shape[-1]).astype(out_ref.dtype)
    attn_ref[...] = attn.astype(attn_ref.dtype)


# ---------------------------------------------------------------------------
# Full Decoder.forward
# ---------------------------------------------------------------------------
def decoder_forward(trg, encoder_conved, encoder_combined, params, kernel_size,
                    matmul_dtype=jnp.bfloat16, block_b=None):
    B, T = trg.shape
    V, E = params["tok_emb"].shape
    H = params["w_emb2hid"].shape[1]
    S = encoder_conved.shape[1]
    L = len(params["convs"])
    K = kernel_size

    EP = _round_up(E, LANE)
    HP = _round_up(H, LANE)
    VP = _round_up(V, LANE)
    SP = _round_up(S, LANE)

    Bb = _choose_block_b(B, T) if block_b is None else block_b
    assert B % Bb == 0
    grid_b = B // Bb
    cdt = matmul_dtype

    # Embedding gathers are glue (plain JAX); dropout = identity (eval mode).
    pos = jnp.arange(T, dtype=jnp.int32)[None, :]
    embed = params["tok_emb"][trg] + params["pos_emb"][pos]           # (B, T, E) f32
    embed_p = _pad_to(embed, (B, T, EP))                              # elementwise use -> keep f32

    # Encoder tensors: lane-pad E and S, transpose encoder_conved once on the host,
    # and pass them in the matmul dtype (they are only ever dot operands).
    encc_t = _pad_to(jnp.swapaxes(encoder_conved, 1, 2), (B, EP, SP)).astype(cdt)  # (B, EP, SP)
    encz_p = _pad_to(encoder_combined, (B, SP, EP)).astype(cdt)                    # (B, SP, EP)

    # Zero-pad weights to lane-dense shapes; weights in bf16 (MXU path + half the DMA),
    # biases stay f32 (added elementwise after the f32 accumulate).
    w_e2h = _pad2(params["w_emb2hid"], EP, HP).astype(cdt)
    b_e2h = _pad2(params["b_emb2hid"], 1, HP)
    w_ah2e = _pad2(params["w_attn_hid2emb"], HP, EP).astype(cdt)
    b_ah2e = _pad2(params["b_attn_hid2emb"], 1, EP)
    w_ae2h = _pad2(params["w_attn_emb2hid"], EP, HP).astype(cdt)
    b_ae2h = _pad2(params["b_attn_emb2hid"], 1, HP)
    w_h2e = _pad2(params["w_hid2emb"], HP, EP).astype(cdt)
    b_h2e = _pad2(params["b_hid2emb"], 1, EP)
    w_fc = _pad2(params["w_fc"], EP, VP).astype(cdt)
    b_fc = _pad2(params["b_fc"], 1, VP)

    # Per-layer GLU conv weights kept per-tap: (L, K, HP, 2*HP) = [value | gate] so the
    # kernel accumulates K matmuls instead of building an im2col concat buffer.
    wcs, bcs = [], []
    for layer in params["convs"]:
        wa = jnp.pad(layer["wa"], ((0, 0), (0, HP - H), (0, HP - H)))   # (K, HP, HP)
        wb = jnp.pad(layer["wb"], ((0, 0), (0, HP - H), (0, HP - H)))
        wcs.append(jnp.concatenate([wa, wb], axis=-1))                  # (K, HP, 2*HP)
        bcs.append(jnp.concatenate([_pad2(layer["ba"], 1, HP),
                                    _pad2(layer["bb"], 1, HP)], axis=-1))
    w_conv = jnp.stack(wcs).astype(cdt)       # (L, K, HP, 2*HP)
    b_conv = jnp.stack(bcs)                   # (L, 1, 2*HP) f32

    # Cost estimate (helps XLA schedule around the fused custom call).
    R = B * T
    bpe = jnp.dtype(cdt).itemsize
    mm_flops = 2 * R * (EP * HP
                        + L * (K * HP * 2 * HP + HP * EP + EP * SP + SP * EP + EP * HP)
                        + HP * EP + EP * VP)
    transc = R * L * (SP + HP)                # softmax exp + GLU sigmoid
    weight_bytes = (sum(int(a.size) * jnp.dtype(a.dtype).itemsize
                        for a in (w_e2h, w_ah2e, w_ae2h, w_h2e, w_fc, w_conv))
                    + sum(int(a.size) * 4 for a in (b_e2h, b_ah2e, b_ae2h, b_h2e, b_fc, b_conv)))
    act_bytes = (embed_p.size * 4 + encc_t.size * bpe + encz_p.size * bpe
                 + B * T * VP * 4 + B * T * SP * 4)
    cost = pl.CostEstimate(flops=int(mm_flops), transcendentals=int(transc),
                           bytes_accessed=int(weight_bytes + act_bytes))

    # Explicit scoped-VMEM budget (defaults are 16/32 MiB; stay under v7x 64 MiB physical).
    block_bytes = (Bb * T * EP * 4 + Bb * EP * SP * bpe + Bb * SP * EP * bpe
                   + Bb * T * VP * 4 + Bb * T * SP * 4)
    vmem_need = 2 * (weight_bytes + block_bytes)      # double-buffered in/out blocks + weights
    vmem_limit = int(min(max(4 * vmem_need, 32 * 1024 * 1024), 56 * 1024 * 1024))

    kernel = functools.partial(_decoder_fused_kernel,
                               num_layers=L, kernel_size=K, src_len=S)

    per_batch = lambda b: (b, 0, 0)
    shared = lambda nd: (lambda b: (0,) * nd)

    out_p, attn_p = pl.pallas_call(
        kernel,
        out_shape=(
            jax.ShapeDtypeStruct((B, T, VP), jnp.float32),
            jax.ShapeDtypeStruct((B, T, SP), jnp.float32),
        ),
        grid=(grid_b,),
        in_specs=[
            pl.BlockSpec((Bb, T, EP), per_batch),
            pl.BlockSpec((Bb, EP, SP), per_batch),
            pl.BlockSpec((Bb, SP, EP), per_batch),
            # Shared (grid-invariant) weights.
            # TODO(synk): at production H/L on v7x, switch these shared-weight specs to
            # pipeline_mode=pl.Buffered(1) (or stream w_conv per layer) to drop the
            # redundant second weight buffer; at these shapes bf16 + vmem_limit suffices.
            pl.BlockSpec((EP, HP), shared(2)), pl.BlockSpec((1, HP), shared(2)),
            pl.BlockSpec((L, K, HP, 2 * HP), shared(4)), pl.BlockSpec((L, 1, 2 * HP), shared(3)),
            pl.BlockSpec((HP, EP), shared(2)), pl.BlockSpec((1, EP), shared(2)),
            pl.BlockSpec((EP, HP), shared(2)), pl.BlockSpec((1, HP), shared(2)),
            pl.BlockSpec((HP, EP), shared(2)), pl.BlockSpec((1, EP), shared(2)),
            pl.BlockSpec((EP, VP), shared(2)), pl.BlockSpec((1, VP), shared(2)),
        ],
        out_specs=(
            pl.BlockSpec((Bb, T, VP), per_batch),
            pl.BlockSpec((Bb, T, SP), per_batch),
        ),
        compiler_params=pltpu.CompilerParams(
            dimension_semantics=("parallel",),
            vmem_limit_bytes=vmem_limit),
        cost_estimate=cost,
    )(embed_p, encc_t, encz_p,
      w_e2h, b_e2h, w_conv, b_conv,
      w_ah2e, b_ah2e, w_ae2h, b_ae2h,
      w_h2e, b_h2e, w_fc, b_fc)

    return out_p[:, :, :V], attn_p[:, :, :S]


def make_params(key, num_embeddings, embedding_dim, hidden_size, num_layers,
                kernel_size, max_length):
    V, E, H, K = num_embeddings, embedding_dim, hidden_size, kernel_size
    ks = jax.random.split(key, 16 + 4 * num_layers)

    def rnd(k, shape):
        return (jax.random.normal(k, shape, jnp.float32) * 0.1).astype(jnp.float32)

    i = iter(range(len(ks)))
    params = {
        "tok_emb": rnd(ks[next(i)], (V, E)),
        "pos_emb": rnd(ks[next(i)], (max_length, E)),
        "w_emb2hid": rnd(ks[next(i)], (E, H)), "b_emb2hid": rnd(ks[next(i)], (1, H)),
        "w_hid2emb": rnd(ks[next(i)], (H, E)), "b_hid2emb": rnd(ks[next(i)], (1, E)),
        "w_attn_hid2emb": rnd(ks[next(i)], (H, E)), "b_attn_hid2emb": rnd(ks[next(i)], (1, E)),
        "w_attn_emb2hid": rnd(ks[next(i)], (E, H)), "b_attn_emb2hid": rnd(ks[next(i)], (1, H)),
        "w_fc": rnd(ks[next(i)], (E, V)), "b_fc": rnd(ks[next(i)], (1, V)),
        "convs": [],
    }
    for _ in range(num_layers):
        # Conv1d(H -> 2H, K) weights pre-split into GLU halves, laid out (K, H_in, H_out).
        params["convs"].append({
            "wa": rnd(ks[next(i)], (K, H, H)),
            "wb": rnd(ks[next(i)], (K, H, H)),
            "ba": rnd(ks[next(i)], (1, H)),
            "bb": rnd(ks[next(i)], (1, H)),
        })
    return params


if __name__ == "__main__":
    # Small, module-consistent shapes.
    num_embeddings = 40   # target vocab
    embedding_dim = 32
    hidden_size = 32
    num_layers = 2
    kernel_size = 3
    max_length = 100
    trg_pad_idx = 0       # unused in forward
    B, T, S = 2, 8, 8     # batch, target length, source length

    key = jax.random.PRNGKey(0)
    k_par, k_trg, k_ec, k_ez = jax.random.split(key, 4)

    params = make_params(k_par, num_embeddings, embedding_dim, hidden_size,
                         num_layers, kernel_size, max_length)

    trg = jax.random.randint(k_trg, (B, T), 0, num_embeddings, dtype=jnp.int32)
    encoder_conved = jax.random.normal(k_ec, (B, S, embedding_dim), jnp.float32)
    encoder_combined = jax.random.normal(k_ez, (B, S, embedding_dim), jnp.float32)

    # TODO(synk): dropout is treated as identity (eval-mode semantics); no RNG dropout in-kernel.
    fwd = jax.jit(functools.partial(decoder_forward, kernel_size=kernel_size))
    output, attention = fwd(trg, encoder_conved, encoder_combined, params)
    jax.block_until_ready((output, attention))

    assert output.shape == (B, T, num_embeddings)
    assert attention.shape == (B, T, S)
    assert bool(jnp.all(jnp.isfinite(output))) and bool(jnp.all(jnp.isfinite(attention)))
    # Padded-S masking sanity: softmax mass over the real source positions ~ 1.
    row_sums = jnp.sum(attention, axis=-1)
    assert bool(jnp.all(jnp.abs(row_sums - 1.0) < 1e-2))
    print("KERNEL_OK")
</pallas_src>

<mosaic_0001>
module attributes {stable_mosaic.version = 11 : i64} {
  func.func @_decoder_fused_kernel(%arg0: i32, %arg1: memref<1x8x128xf32, #tpu.memory_space<vmem>>, %arg2: memref<1x128x128xbf16, #tpu.memory_space<vmem>>, %arg3: memref<1x128x128xbf16, #tpu.memory_space<vmem>>, %arg4: memref<128x128xbf16, #tpu.memory_space<vmem>>, %arg5: memref<1x128xf32, #tpu.memory_space<vmem>>, %arg6: memref<2x3x128x256xbf16, #tpu.memory_space<vmem>>, %arg7: memref<2x1x256xf32, #tpu.memory_space<vmem>>, %arg8: memref<128x128xbf16, #tpu.memory_space<vmem>>, %arg9: memref<1x128xf32, #tpu.memory_space<vmem>>, %arg10: memref<128x128xbf16, #tpu.memory_space<vmem>>, %arg11: memref<1x128xf32, #tpu.memory_space<vmem>>, %arg12: memref<128x128xbf16, #tpu.memory_space<vmem>>, %arg13: memref<1x128xf32, #tpu.memory_space<vmem>>, %arg14: memref<128x128xbf16, #tpu.memory_space<vmem>>, %arg15: memref<1x128xf32, #tpu.memory_space<vmem>>, %arg16: memref<1x8x128xf32, #tpu.memory_space<vmem>>, %arg17: memref<1x8x128xf32, #tpu.memory_space<vmem>>) attributes {dimension_semantics = [#tpu.dimension_semantics<parallel>], iteration_bounds = array<i64: 2>, scalar_prefetch = 0 : i64, scratch_operands = 0 : i64, tpu.core_type = #tpu.core_type<tc>, window_params = [{transform_indices = @transform_0, window_bounds = array<i64: 1, 8, 128>}, {transform_indices = @transform_1, window_bounds = array<i64: 1, 128, 128>}, {transform_indices = @transform_2, window_bounds = array<i64: 1, 128, 128>}, {pipeline_mode = #tpu.pipeline_mode<synchronous>, transform_indices = @transform_3, window_bounds = array<i64: 128, 128>}, {pipeline_mode = #tpu.pipeline_mode<synchronous>, transform_indices = @transform_4, window_bounds = array<i64: 1, 128>}, {pipeline_mode = #tpu.pipeline_mode<synchronous>, transform_indices = @transform_5, window_bounds = array<i64: 2, 3, 128, 256>}, {pipeline_mode = #tpu.pipeline_mode<synchronous>, transform_indices = @transform_6, window_bounds = array<i64: 2, 1, 256>}, {pipeline_mode = #tpu.pipeline_mode<synchronous>, transform_indices = @transform_7, window_bounds = array<i64: 128, 128>}, {pipeline_mode = #tpu.pipeline_mode<synchronous>, transform_indices = @transform_8, window_bounds = array<i64: 1, 128>}, {pipeline_mode = #tpu.pipeline_mode<synchronous>, transform_indices = @transform_9, window_bounds = array<i64: 128, 128>}, {pipeline_mode = #tpu.pipeline_mode<synchronous>, transform_indices = @transform_10, window_bounds = array<i64: 1, 128>}, {pipeline_mode = #tpu.pipeline_mode<synchronous>, transform_indices = @transform_11, window_bounds = array<i64: 128, 128>}, {pipeline_mode = #tpu.pipeline_mode<synchronous>, transform_indices = @transform_12, window_bounds = array<i64: 1, 128>}, {pipeline_mode = #tpu.pipeline_mode<synchronous>, transform_indices = @transform_13, window_bounds = array<i64: 128, 128>}, {pipeline_mode = #tpu.pipeline_mode<synchronous>, transform_indices = @transform_14, window_bounds = array<i64: 1, 128>}, {transform_indices = @transform_15, window_bounds = array<i64: 1, 8, 128>}, {transform_indices = @transform_16, window_bounds = array<i64: 1, 8, 128>}]} {
    %c0 = arith.constant 0 : index
    %c0_0 = arith.constant 0 : index
    %c0_1 = arith.constant 0 : index
    %0 = vector.load %arg1[%c0, %c0_0, %c0_1] : memref<1x8x128xf32, #tpu.memory_space<vmem>>, vector<1x8x128xf32>
    %1 = vector.shape_cast %0 : vector<1x8x128xf32> to vector<8x128xf32>
    %c0_2 = arith.constant 0 : index
    %c0_3 = arith.constant 0 : index
    %c0_4 = arith.constant 0 : index
    %2 = vector.load %arg2[%c0_2, %c0_3, %c0_4] : memref<1x128x128xbf16, #tpu.memory_space<vmem>>, vector<1x128x128xbf16>
    %c0_5 = arith.constant 0 : index
    %c0_6 = arith.constant 0 : index
    %c0_7 = arith.constant 0 : index
    %3 = vector.load %arg3[%c0_5, %c0_6, %c0_7] : memref<1x128x128xbf16, #tpu.memory_space<vmem>>, vector<1x128x128xbf16>
    %4 = arith.truncf %1 : vector<8x128xf32> to vector<8x128xbf16>
    %c0_8 = arith.constant 0 : index
    %c0_9 = arith.constant 0 : index
    %5 = vector.load %arg4[%c0_8, %c0_9] : memref<128x128xbf16, #tpu.memory_space<vmem>>, vector<128x128xbf16>
    %cst = arith.constant dense<0.000000e+00> : vector<8x128xf32>
    %6 = tpu.matmul %4, %5, %cst {dimension_numbers = #tpu.dot_dimension_numbers<[1], [0], [0], [1], [0, 0, 1, 1], [], []>} : vector<8x128xbf16>, vector<128x128xbf16>, vector<8x128xf32> -> vector<8x128xf32>
    %c0_10 = arith.constant 0 : index
    %c0_11 = arith.constant 0 : index
    %7 = vector.load %arg5[%c0_10, %c0_11] : memref<1x128xf32, #tpu.memory_space<vmem>>, vector<1x128xf32>
    %8 = vector.broadcast %7 : vector<1x128xf32> to vector<8x128xf32>
    %9 = arith.addf %6, %8 : vector<8x128xf32>
    %10 = tpu.iota {dimensions = array<i32: 0>} : vector<8x128xi32>
    %c8_i32 = arith.constant 8 : i32
    %c0_i32 = arith.constant 0 : i32
    %11 = arith.cmpi eq, %c8_i32, %c0_i32 : i32
    %c1_i32 = arith.constant 1 : i32
    %12 = arith.select %11, %c1_i32, %c8_i32 : i32
    %13 = vector.broadcast %12 : i32 to vector<8x128xi32>
    %14 = arith.remsi %10, %13 : vector<8x128xi32>
    %c0_i32_12 = arith.constant 0 : i32
    %15 = vector.broadcast %c0_i32_12 : i32 to vector<8x128xi32>
    %16 = arith.cmpi ne, %14, %15 : vector<8x128xi32>
    %c0_i32_13 = arith.constant 0 : i32
    %17 = vector.broadcast %c0_i32_13 : i32 to vector<8x128xi32>
    %18 = arith.cmpi slt, %14, %17 : vector<8x128xi32>
    %c0_i32_14 = arith.constant 0 : i32
    %19 = arith.cmpi slt, %12, %c0_i32_14 : i32
    %20 = vector.broadcast %19 : i1 to vector<8x128xi1>
    %21 = vector.broadcast %20 : vector<8x128xi1> to vector<8x128xi1>
    %22 = arith.xori %18, %21 : vector<8x128xi1>
    %23 = arith.andi %22, %16 : vector<8x128xi1>
    %24 = vector.broadcast %12 : i32 to vector<8x128xi32>
    %25 = arith.addi %14, %24 : vector<8x128xi32>
    %26 = arith.select %23, %25, %14 : vector<8x128xi1>, vector<8x128xi32>
    %27 = tpu.iota {dimensions = array<i32: 2>} : vector<1x8x128xi32>
    %c8_i32_15 = arith.constant 8 : i32
    %28 = vector.broadcast %c8_i32_15 : i32 to vector<1x8x128xi32>
    %29 = arith.cmpi slt, %27, %28 : vector<1x8x128xi32>
    %c0_16 = arith.constant 0 : index
    %c0_17 = arith.constant 0 : index
    %c0_18 = arith.constant 0 : index
    %30 = vector.load %arg7[%c0_16, %c0_17, %c0_18] : memref<2x1x256xf32, #tpu.memory_space<vmem>>, vector<1x1x256xf32>
    %31 = vector.shape_cast %30 : vector<1x1x256xf32> to vector<1x256xf32>
    %c2_i32 = arith.constant 2 : i32
    %32 = vector.broadcast %c2_i32 : i32 to vector<8x128xi32>
    %33 = arith.cmpi sge, %26, %32 : vector<8x128xi32>
    %c2_i32_19 = arith.constant 2 : i32
    %34 = tpu.dynamic_rotate %9 by %c2_i32_19 dim 0 : vector<8x128xf32>, i32 -> vector<8x128xf32>
    %cst_20 = arith.constant 0.000000e+00 : f32
    %35 = vector.broadcast %cst_20 : f32 to vector<8x128xf32>
    %36 = arith.select %33, %34, %35 : vector<8x128xi1>, vector<8x128xf32>
    %37 = arith.truncf %36 : vector<8x128xf32> to vector<8x128xbf16>
    %c0_21 = arith.constant 0 : index
    %c0_22 = arith.constant 0 : index
    %c0_23 = arith.constant 0 : index
    %c0_24 = arith.constant 0 : index
    %38 = vector.load %arg6[%c0_21, %c0_22, %c0_23, %c0_24] : memref<2x3x128x256xbf16, #tpu.memory_space<vmem>>, vector<1x1x128x256xbf16>
    %39 = vector.shape_cast %38 : vector<1x1x128x256xbf16> to vector<128x256xbf16>
    %cst_25 = arith.constant dense<0.000000e+00> : vector<8x256xf32>
    %40 = tpu.matmul %37, %39, %cst_25 {dimension_numbers = #tpu.dot_dimension_numbers<[1], [0], [0], [1], [0, 0, 1, 1], [], []>} : vector<8x128xbf16>, vector<128x256xbf16>, vector<8x256xf32> -> vector<8x256xf32>
    %41 = vector.broadcast %31 : vector<1x256xf32> to vector<8x256xf32>
    %42 = arith.addf %41, %40 : vector<8x256xf32>
    %c1_i32_26 = arith.constant 1 : i32
    %43 = vector.broadcast %c1_i32_26 : i32 to vector<8x128xi32>
    %44 = arith.cmpi sge, %26, %43 : vector<8x128xi32>
    %c1_i32_27 = arith.constant 1 : i32
    %45 = tpu.dynamic_rotate %9 by %c1_i32_27 dim 0 : vector<8x128xf32>, i32 -> vector<8x128xf32>
    %cst_28 = arith.constant 0.000000e+00 : f32
    %46 = vector.broadcast %cst_28 : f32 to vector<8x128xf32>
    %47 = arith.select %44, %45, %46 : vector<8x128xi1>, vector<8x128xf32>
    %48 = arith.truncf %47 : vector<8x128xf32> to vector<8x128xbf16>
    %c0_29 = arith.constant 0 : index
    %c1 = arith.constant 1 : index
    %c0_30 = arith.constant 0 : index
    %c0_31 = arith.constant 0 : index
    %49 = vector.load %arg6[%c0_29, %c1, %c0_30, %c0_31] : memref<2x3x128x256xbf16, #tpu.memory_space<vmem>>, vector<1x1x128x256xbf16>
    %50 = vector.shape_cast %49 : vector<1x1x128x256xbf16> to vector<128x256xbf16>
    %cst_32 = arith.constant dense<0.000000e+00> : vector<8x256xf32>
    %51 = tpu.matmul %48, %50, %cst_32 {dimension_numbers = #tpu.dot_dimension_numbers<[1], [0], [0], [1], [0, 0, 1, 1], [], []>} : vector<8x128xbf16>, vector<128x256xbf16>, vector<8x256xf32> -> vector<8x256xf32>
    %52 = arith.addf %42, %51 : vector<8x256xf32>
    %53 = arith.truncf %9 : vector<8x128xf32> to vector<8x128xbf16>
    %c0_33 = arith.constant 0 : index
    %c2 = arith.constant 2 : index
    %c0_34 = arith.constant 0 : index
    %c0_35 = arith.constant 0 : index
    %54 = vector.load %arg6[%c0_33, %c2, %c0_34, %c0_35] : memref<2x3x128x256xbf16, #tpu.memory_space<vmem>>, vector<1x1x128x256xbf16>
    %55 = vector.shape_cast %54 : vector<1x1x128x256xbf16> to vector<128x256xbf16>
    %cst_36 = arith.constant dense<0.000000e+00> : vector<8x256xf32>
    %56 = tpu.matmul %53, %55, %cst_36 {dimension_numbers = #tpu.dot_dimension_numbers<[1], [0], [0], [1], [0, 0, 1, 1], [], []>} : vector<8x128xbf16>, vector<128x256xbf16>, vector<8x256xf32> -> vector<8x256xf32>
    %57 = arith.addf %52, %56 : vector<8x256xf32>
    %58 = vector.extract_strided_slice %57 {offsets = [0, 0], sizes = [8, 128], strides = [1, 1]} : vector<8x256xf32> to vector<8x128xf32>
    %59 = vector.extract_strided_slice %57 {offsets = [0, 128], sizes = [8, 128], strides = [1, 1]} : vector<8x256xf32> to vector<8x128xf32>
    %60 = arith.negf %59 : vector<8x128xf32>
    %61 = math.exp %60 : vector<8x128xf32>
    %cst_37 = arith.constant 1.000000e+00 : f32
    %62 = vector.broadcast %cst_37 : f32 to vector<8x128xf32>
    %63 = arith.addf %62, %61 : vector<8x128xf32>
    %64 = arith.divf %62, %63 : vector<8x128xf32>
    %65 = arith.mulf %58, %64 : vector<8x128xf32>
    %66 = arith.truncf %65 : vector<8x128xf32> to vector<8x128xbf16>
    %c0_38 = arith.constant 0 : index
    %c0_39 = arith.constant 0 : index
    %67 = vector.load %arg8[%c0_38, %c0_39] : memref<128x128xbf16, #tpu.memory_space<vmem>>, vector<128x128xbf16>
    %cst_40 = arith.constant dense<0.000000e+00> : vector<8x128xf32>
    %68 = tpu.matmul %66, %67, %cst_40 {dimension_numbers = #tpu.dot_dimension_numbers<[1], [0], [0], [1], [0, 0, 1, 1], [], []>} : vector<8x128xbf16>, vector<128x128xbf16>, vector<8x128xf32> -> vector<8x128xf32>
    %c0_41 = arith.constant 0 : index
    %c0_42 = arith.constant 0 : index
    %69 = vector.load %arg9[%c0_41, %c0_42] : memref<1x128xf32, #tpu.memory_space<vmem>>, vector<1x128xf32>
    %70 = vector.broadcast %69 : vector<1x128xf32> to vector<8x128xf32>
    %71 = arith.addf %68, %70 : vector<8x128xf32>
    %72 = arith.addf %71, %1 : vector<8x128xf32>
    %cst_43 = arith.constant 0.707106769 : f32
    %73 = vector.broadcast %cst_43 : f32 to vector<8x128xf32>
    %74 = arith.mulf %72, %73 : vector<8x128xf32>
    %75 = vector.shape_cast %74 : vector<8x128xf32> to vector<1x8x128xf32>
    %76 = arith.truncf %75 : vector<1x8x128xf32> to vector<1x8x128xbf16>
    "tpu.trace_start"() <{level = 10 : i32, message = "btd,bds->bts"}> : () -> ()
    %cst_44 = arith.constant dense<0.000000e+00> : vector<1x8x128xf32>
    %77 = tpu.matmul %76, %2, %cst_44 {dimension_numbers = #tpu.dot_dimension_numbers<[2], [1], [1], [2], [0, 0, 0, 1, 1, 2], [0], [0]>} : vector<1x8x128xbf16>, vector<1x128x128xbf16>, vector<1x8x128xf32> -> vector<1x8x128xf32>
    %cst_45 = arith.constant -1.000000e+30 : f32
    "tpu.trace_stop"() : () -> ()
    %78 = vector.broadcast %cst_45 : f32 to vector<1x8x128xf32>
    %79 = arith.select %29, %77, %78 : vector<1x8x128xi1>, vector<1x8x128xf32>
    %cst_46 = arith.constant dense<0xFF800000> : vector<1x8xf32>
    %80 = vector.multi_reduction <maximumf>, %79, %cst_46 [2] : vector<1x8x128xf32> to vector<1x8xf32>
    %81 = vector.shape_cast %80 : vector<1x8xf32> to vector<1x8x1xf32>
    %82 = vector.broadcast %81 : vector<1x8x1xf32> to vector<1x8x128xf32>
    %83 = arith.subf %79, %82 : vector<1x8x128xf32>
    %84 = math.exp %83 : vector<1x8x128xf32>
    %cst_47 = arith.constant dense<0.000000e+00> : vector<1x8xf32>
    %85 = vector.multi_reduction <add>, %84, %cst_47 [2] : vector<1x8x128xf32> to vector<1x8xf32>
    %86 = vector.shape_cast %85 : vector<1x8xf32> to vector<1x8x1xf32>
    %87 = tpu.reciprocal %86 {approx = true} : vector<1x8x1xf32> -> vector<1x8x1xf32>
    %88 = vector.broadcast %87 : vector<1x8x1xf32> to vector<1x8x128xf32>
    %89 = arith.mulf %84, %88 : vector<1x8x128xf32>
    %90 = arith.truncf %89 : vector<1x8x128xf32> to vector<1x8x128xbf16>
    "tpu.trace_start"() <{level = 10 : i32, message = "bts,bse->bte"}> : () -> ()
    %cst_48 = arith.constant dense<0.000000e+00> : vector<1x8x128xf32>
    %91 = tpu.matmul %90, %3, %cst_48 {dimension_numbers = #tpu.dot_dimension_numbers<[2], [1], [1], [2], [0, 0, 0, 1, 1, 2], [0], [0]>} : vector<1x8x128xbf16>, vector<1x128x128xbf16>, vector<1x8x128xf32> -> vector<1x8x128xf32>
    "tpu.trace_stop"() : () -> ()
    %92 = vector.shape_cast %91 : vector<1x8x128xf32> to vector<8x128xf32>
    %93 = arith.truncf %92 : vector<8x128xf32> to vector<8x128xbf16>
    %c0_49 = arith.constant 0 : index
    %c0_50 = arith.constant 0 : index
    %94 = vector.load %arg10[%c0_49, %c0_50] : memref<128x128xbf16, #tpu.memory_space<vmem>>, vector<128x128xbf16>
    %cst_51 = arith.constant dense<0.000000e+00> : vector<8x128xf32>
    %95 = tpu.matmul %93, %94, %cst_51 {dimension_numbers = #tpu.dot_dimension_numbers<[1], [0], [0], [1], [0, 0, 1, 1], [], []>} : vector<8x128xbf16>, vector<128x128xbf16>, vector<8x128xf32> -> vector<8x128xf32>
    %c0_52 = arith.constant 0 : index
    %c0_53 = arith.constant 0 : index
    %96 = vector.load %arg11[%c0_52, %c0_53] : memref<1x128xf32, #tpu.memory_space<vmem>>, vector<1x128xf32>
    %97 = vector.broadcast %96 : vector<1x128xf32> to vector<8x128xf32>
    %98 = arith.addf %95, %97 : vector<8x128xf32>
    %99 = arith.addf %65, %98 : vector<8x128xf32>
    %cst_54 = arith.constant 0.707106769 : f32
    %100 = vector.broadcast %cst_54 : f32 to vector<8x128xf32>
    %101 = arith.mulf %99, %100 : vector<8x128xf32>
    %102 = arith.addf %101, %9 : vector<8x128xf32>
    %cst_55 = arith.constant 0.707106769 : f32
    %103 = vector.broadcast %cst_55 : f32 to vector<8x128xf32>
    %104 = arith.mulf %102, %103 : vector<8x128xf32>
    %c1_56 = arith.constant 1 : index
    %c0_57 = arith.constant 0 : index
    %c0_58 = arith.constant 0 : index
    %105 = vector.load %arg7[%c1_56, %c0_57, %c0_58] : memref<2x1x256xf32, #tpu.memory_space<vmem>>, vector<1x1x256xf32>
    %106 = vector.shape_cast %105 : vector<1x1x256xf32> to vector<1x256xf32>
    %c2_i32_59 = arith.constant 2 : i32
    %107 = vector.broadcast %c2_i32_59 : i32 to vector<8x128xi32>
    %108 = arith.cmpi sge, %26, %107 : vector<8x128xi32>
    %c2_i32_60 = arith.constant 2 : i32
    %109 = tpu.dynamic_rotate %104 by %c2_i32_60 dim 0 : vector<8x128xf32>, i32 -> vector<8x128xf32>
    %cst_61 = arith.constant 0.000000e+00 : f32
    %110 = vector.broadcast %cst_61 : f32 to vector<8x128xf32>
    %111 = arith.select %108, %109, %110 : vector<8x128xi1>, vector<8x128xf32>
    %112 = arith.truncf %111 : vector<8x128xf32> to vector<8x128xbf16>
    %c1_62 = arith.constant 1 : index
    %c0_63 = arith.constant 0 : index
    %c0_64 = arith.constant 0 : index
    %c0_65 = arith.constant 0 : index
    %113 = vector.load %arg6[%c1_62, %c0_63, %c0_64, %c0_65] : memref<2x3x128x256xbf16, #tpu.memory_space<vmem>>, vector<1x1x128x256xbf16>
    %114 = vector.shape_cast %113 : vector<1x1x128x256xbf16> to vector<128x256xbf16>
    %cst_66 = arith.constant dense<0.000000e+00> : vector<8x256xf32>
    %115 = tpu.matmul %112, %114, %cst_66 {dimension_numbers = #tpu.dot_dimension_numbers<[1], [0], [0], [1], [0, 0, 1, 1], [], []>} : vector<8x128xbf16>, vector<128x256xbf16>, vector<8x256xf32> -> vector<8x256xf32>
    %116 = vector.broadcast %106 : vector<1x256xf32> to vector<8x256xf32>
    %117 = arith.addf %116, %115 : vector<8x256xf32>
    %c1_i32_67 = arith.constant 1 : i32
    %118 = vector.broadcast %c1_i32_67 : i32 to vector<8x128xi32>
    %119 = arith.cmpi sge, %26, %118 : vector<8x128xi32>
    %c1_i32_68 = arith.constant 1 : i32
    %120 = tpu.dynamic_rotate %104 by %c1_i32_68 dim 0 : vector<8x128xf32>, i32 -> vector<8x128xf32>
    %cst_69 = arith.constant 0.000000e+00 : f32
    %121 = vector.broadcast %cst_69 : f32 to vector<8x128xf32>
    %122 = arith.select %119, %120, %121 : vector<8x128xi1>, vector<8x128xf32>
    %123 = arith.truncf %122 : vector<8x128xf32> to vector<8x128xbf16>
    %c1_70 = arith.constant 1 : index
    %c1_71 = arith.constant 1 : index
    %c0_72 = arith.constant 0 : index
    %c0_73 = arith.constant 0 : index
    %124 = vector.load %arg6[%c1_70, %c1_71, %c0_72, %c0_73] : memref<2x3x128x256xbf16, #tpu.memory_space<vmem>>, vector<1x1x128x256xbf16>
    %125 = vector.shape_cast %124 : vector<1x1x128x256xbf16> to vector<128x256xbf16>
    %cst_74 = arith.constant dense<0.000000e+00> : vector<8x256xf32>
    %126 = tpu.matmul %123, %125, %cst_74 {dimension_numbers = #tpu.dot_dimension_numbers<[1], [0], [0], [1], [0, 0, 1, 1], [], []>} : vector<8x128xbf16>, vector<128x256xbf16>, vector<8x256xf32> -> vector<8x256xf32>
    %127 = arith.addf %117, %126 : vector<8x256xf32>
    %128 = arith.truncf %104 : vector<8x128xf32> to vector<8x128xbf16>
    %c1_75 = arith.constant 1 : index
    %c2_76 = arith.constant 2 : index
    %c0_77 = arith.constant 0 : index
    %c0_78 = arith.constant 0 : index
    %129 = vector.load %arg6[%c1_75, %c2_76, %c0_77, %c0_78] : memref<2x3x128x256xbf16, #tpu.memory_space<vmem>>, vector<1x1x128x256xbf16>
    %130 = vector.shape_cast %129 : vector<1x1x128x256xbf16> to vector<128x256xbf16>
    %cst_79 = arith.constant dense<0.000000e+00> : vector<8x256xf32>
    %131 = tpu.matmul %128, %130, %cst_79 {dimension_numbers = #tpu.dot_dimension_numbers<[1], [0], [0], [1], [0, 0, 1, 1], [], []>} : vector<8x128xbf16>, vector<128x256xbf16>, vector<8x256xf32> -> vector<8x256xf32>
    %132 = arith.addf %127, %131 : vector<8x256xf32>
    %133 = vector.extract_strided_slice %132 {offsets = [0, 0], sizes = [8, 128], strides = [1, 1]} : vector<8x256xf32> to vector<8x128xf32>
    %134 = vector.extract_strided_slice %132 {offsets = [0, 128], sizes = [8, 128], strides = [1, 1]} : vector<8x256xf32> to vector<8x128xf32>
    %135 = arith.negf %134 : vector<8x128xf32>
    %136 = math.exp %135 : vector<8x128xf32>
    %cst_80 = arith.constant 1.000000e+00 : f32
    %137 = vector.broadcast %cst_80 : f32 to vector<8x128xf32>
    %138 = arith.addf %137, %136 : vector<8x128xf32>
    %139 = arith.divf %137, %138 : vector<8x128xf32>
    %140 = arith.mulf %133, %139 : vector<8x128xf32>
    %141 = arith.truncf %140 : vector<8x128xf32> to vector<8x128xbf16>
    %c0_81 = arith.constant 0 : index
    %c0_82 = arith.constant 0 : index
    %142 = vector.load %arg8[%c0_81, %c0_82] : memref<128x128xbf16, #tpu.memory_space<vmem>>, vector<128x128xbf16>
    %cst_83 = arith.constant dense<0.000000e+00> : vector<8x128xf32>
    %143 = tpu.matmul %141, %142, %cst_83 {dimension_numbers = #tpu.dot_dimension_numbers<[1], [0], [0], [1], [0, 0, 1, 1], [], []>} : vector<8x128xbf16>, vector<128x128xbf16>, vector<8x128xf32> -> vector<8x128xf32>
    %c0_84 = arith.constant 0 : index
    %c0_85 = arith.constant 0 : index
    %144 = vector.load %arg9[%c0_84, %c0_85] : memref<1x128xf32, #tpu.memory_space<vmem>>, vector<1x128xf32>
    %145 = vector.broadcast %144 : vector<1x128xf32> to vector<8x128xf32>
    %146 = arith.addf %143, %145 : vector<8x128xf32>
    %147 = arith.addf %146, %1 : vector<8x128xf32>
    %cst_86 = arith.constant 0.707106769 : f32
    %148 = vector.broadcast %cst_86 : f32 to vector<8x128xf32>
    %149 = arith.mulf %147, %148 : vector<8x128xf32>
    %150 = vector.shape_cast %149 : vector<8x128xf32> to vector<1x8x128xf32>
    %151 = arith.truncf %150 : vector<1x8x128xf32> to vector<1x8x128xbf16>
    "tpu.trace_start"() <{level = 10 : i32, message = "btd,bds->bts"}> : () -> ()
    %cst_87 = arith.constant dense<0.000000e+00> : vector<1x8x128xf32>
    %152 = tpu.matmul %151, %2, %cst_87 {dimension_numbers = #tpu.dot_dimension_numbers<[2], [1], [1], [2], [0, 0, 0, 1, 1, 2], [0], [0]>} : vector<1x8x128xbf16>, vector<1x128x128xbf16>, vector<1x8x128xf32> -> vector<1x8x128xf32>
    %cst_88 = arith.constant -1.000000e+30 : f32
    "tpu.trace_stop"() : () -> ()
    %153 = vector.broadcast %cst_88 : f32 to vector<1x8x128xf32>
    %154 = arith.select %29, %152, %153 : vector<1x8x128xi1>, vector<1x8x128xf32>
    %cst_89 = arith.constant dense<0xFF800000> : vector<1x8xf32>
    %155 = vector.multi_reduction <maximumf>, %154, %cst_89 [2] : vector<1x8x128xf32> to vector<1x8xf32>
    %156 = vector.shape_cast %155 : vector<1x8xf32> to vector<1x8x1xf32>
    %157 = vector.broadcast %156 : vector<1x8x1xf32> to vector<1x8x128xf32>
    %158 = arith.subf %154, %157 : vector<1x8x128xf32>
    %159 = math.exp %158 : vector<1x8x128xf32>
    %cst_90 = arith.constant dense<0.000000e+00> : vector<1x8xf32>
    %160 = vector.multi_reduction <add>, %159, %cst_90 [2] : vector<1x8x128xf32> to vector<1x8xf32>
    %161 = vector.shape_cast %160 : vector<1x8xf32> to vector<1x8x1xf32>
    %162 = tpu.reciprocal %161 {approx = true} : vector<1x8x1xf32> -> vector<1x8x1xf32>
    %163 = vector.broadcast %162 : vector<1x8x1xf32> to vector<1x8x128xf32>
    %164 = arith.mulf %159, %163 : vector<1x8x128xf32>
    %165 = arith.truncf %164 : vector<1x8x128xf32> to vector<1x8x128xbf16>
    "tpu.trace_start"() <{level = 10 : i32, message = "bts,bse->bte"}> : () -> ()
    %cst_91 = arith.constant dense<0.000000e+00> : vector<1x8x128xf32>
    %166 = tpu.matmul %165, %3, %cst_91 {dimension_numbers = #tpu.dot_dimension_numbers<[2], [1], [1], [2], [0, 0, 0, 1, 1, 2], [0], [0]>} : vector<1x8x128xbf16>, vector<1x128x128xbf16>, vector<1x8x128xf32> -> vector<1x8x128xf32>
    "tpu.trace_stop"() : () -> ()
    %167 = vector.shape_cast %166 : vector<1x8x128xf32> to vector<8x128xf32>
    %168 = arith.truncf %167 : vector<8x128xf32> to vector<8x128xbf16>
    %c0_92 = arith.constant 0 : index
    %c0_93 = arith.constant 0 : index
    %169 = vector.load %arg10[%c0_92, %c0_93] : memref<128x128xbf16, #tpu.memory_space<vmem>>, vector<128x128xbf16>
    %cst_94 = arith.constant dense<0.000000e+00> : vector<8x128xf32>
    %170 = tpu.matmul %168, %169, %cst_94 {dimension_numbers = #tpu.dot_dimension_numbers<[1], [0], [0], [1], [0, 0, 1, 1], [], []>} : vector<8x128xbf16>, vector<128x128xbf16>, vector<8x128xf32> -> vector<8x128xf32>
    %c0_95 = arith.constant 0 : index
    %c0_96 = arith.constant 0 : index
    %171 = vector.load %arg11[%c0_95, %c0_96] : memref<1x128xf32, #tpu.memory_space<vmem>>, vector<1x128xf32>
    %172 = vector.broadcast %171 : vector<1x128xf32> to vector<8x128xf32>
    %173 = arith.addf %170, %172 : vector<8x128xf32>
    %174 = arith.addf %140, %173 : vector<8x128xf32>
    %cst_97 = arith.constant 0.707106769 : f32
    %175 = vector.broadcast %cst_97 : f32 to vector<8x128xf32>
    %176 = arith.mulf %174, %175 : vector<8x128xf32>
    %177 = arith.addf %176, %104 : vector<8x128xf32>
    %cst_98 = arith.constant 0.707106769 : f32
    %178 = vector.broadcast %cst_98 : f32 to vector<8x128xf32>
    %179 = arith.mulf %177, %178 : vector<8x128xf32>
    %180 = arith.truncf %179 : vector<8x128xf32> to vector<8x128xbf16>
    %c0_99 = arith.constant 0 : index
    %c0_100 = arith.constant 0 : index
    %181 = vector.load %arg12[%c0_99, %c0_100] : memref<128x128xbf16, #tpu.memory_space<vmem>>, vector<128x128xbf16>
    %cst_101 = arith.constant dense<0.000000e+00> : vector<8x128xf32>
    %182 = tpu.matmul %180, %181, %cst_101 {dimension_numbers = #tpu.dot_dimension_numbers<[1], [0], [0], [1], [0, 0, 1, 1], [], []>} : vector<8x128xbf16>, vector<128x128xbf16>, vector<8x128xf32> -> vector<8x128xf32>
    %c0_102 = arith.constant 0 : index
    %c0_103 = arith.constant 0 : index
    %183 = vector.load %arg13[%c0_102, %c0_103] : memref<1x128xf32, #tpu.memory_space<vmem>>, vector<1x128xf32>
    %184 = vector.broadcast %183 : vector<1x128xf32> to vector<8x128xf32>
    %185 = arith.addf %182, %184 : vector<8x128xf32>
    %186 = arith.truncf %185 : vector<8x128xf32> to vector<8x128xbf16>
    %c0_104 = arith.constant 0 : index
    %c0_105 = arith.constant 0 : index
    %187 = vector.load %arg14[%c0_104, %c0_105] : memref<128x128xbf16, #tpu.memory_space<vmem>>, vector<128x128xbf16>
    %cst_106 = arith.constant dense<0.000000e+00> : vector<8x128xf32>
    %188 = tpu.matmul %186, %187, %cst_106 {dimension_numbers = #tpu.dot_dimension_numbers<[1], [0], [0], [1], [0, 0, 1, 1], [], []>} : vector<8x128xbf16>, vector<128x128xbf16>, vector<8x128xf32> -> vector<8x128xf32>
    %c0_107 = arith.constant 0 : index
    %c0_108 = arith.constant 0 : index
    %189 = vector.load %arg15[%c0_107, %c0_108] : memref<1x128xf32, #tpu.memory_space<vmem>>, vector<1x128xf32>
    %190 = vector.broadcast %189 : vector<1x128xf32> to vector<8x128xf32>
    %191 = arith.addf %188, %190 : vector<8x128xf32>
    %192 = vector.shape_cast %191 : vector<8x128xf32> to vector<1x8x128xf32>
    %c0_109 = arith.constant 0 : index
    %c0_110 = arith.constant 0 : index
    %c0_111 = arith.constant 0 : index
    %193 = vector.load %arg16[%c0_109, %c0_110, %c0_111] : memref<1x8x128xf32, #tpu.memory_space<vmem>>, vector<1x8x128xf32>
    tpu.vector_store %arg16[%c0_109, %c0_110, %c0_111], %192 {strides = array<i32>} : memref<1x8x128xf32, #tpu.memory_space<vmem>>, vector<1x8x128xf32>,
    %c0_112 = arith.constant 0 : index
    %c0_113 = arith.constant 0 : index
    %c0_114 = arith.constant 0 : index
    %194 = vector.load %arg17[%c0_112, %c0_113, %c0_114] : memref<1x8x128xf32, #tpu.memory_space<vmem>>, vector<1x8x128xf32>
    tpu.vector_store %arg17[%c0_112, %c0_113, %c0_114], %164 {strides = array<i32>} : memref<1x8x128xf32, #tpu.memory_space<vmem>>, vector<1x8x128xf32>,
    return
  }
  func.func @transform_0(%arg0: i32) -> (i32, i32, i32) {
    %c0_i32 = arith.constant 0 : i32
    %c0_i32_0 = arith.constant 0 : i32
    %c0_i32_1 = arith.constant 0 : i32
    return %arg0, %c0_i32, %c0_i32_0 : i32, i32, i32
  }
  func.func @transform_1(%arg0: i32) -> (i32, i32, i32) {
    %c0_i32 = arith.constant 0 : i32
    %c0_i32_0 = arith.constant 0 : i32
    %c0_i32_1 = arith.constant 0 : i32
    return %arg0, %c0_i32, %c0_i32_0 : i32, i32, i32
  }
  func.func @transform_2(%arg0: i32) -> (i32, i32, i32) {
    %c0_i32 = arith.constant 0 : i32
    %c0_i32_0 = arith.constant 0 : i32
    %c0_i32_1 = arith.constant 0 : i32
    return %arg0, %c0_i32, %c0_i32_0 : i32, i32, i32
  }
  func.func @transform_3(%arg0: i32) -> (i32, i32) {
    %c0_i32 = arith.constant 0 : i32
    %c0_i32_0 = arith.constant 0 : i32
    %c0_i32_1 = arith.constant 0 : i32
    return %c0_i32, %c0_i32_0 : i32, i32
  }
  func.func @transform_4(%arg0: i32) -> (i32, i32) {
    %c0_i32 = arith.constant 0 : i32
    %c0_i32_0 = arith.constant 0 : i32
    %c0_i32_1 = arith.constant 0 : i32
    return %c0_i32, %c0_i32_0 : i32, i32
  }
  func.func @transform_5(%arg0: i32) -> (i32, i32, i32, i32) {
    %c0_i32 = arith.constant 0 : i32
    %c0_i32_0 = arith.constant 0 : i32
    %c0_i32_1 = arith.constant 0 : i32
    %c0_i32_2 = arith.constant 0 : i32
    %c0_i32_3 = arith.constant 0 : i32
    return %c0_i32, %c0_i32_0, %c0_i32_1, %c0_i32_2 : i32, i32, i32, i32
  }
  func.func @transform_6(%arg0: i32) -> (i32, i32, i32) {
    %c0_i32 = arith.constant 0 : i32
    %c0_i32_0 = arith.constant 0 : i32
    %c0_i32_1 = arith.constant 0 : i32
    %c0_i32_2 = arith.constant 0 : i32
    return %c0_i32, %c0_i32_0, %c0_i32_1 : i32, i32, i32
  }
  func.func @transform_7(%arg0: i32) -> (i32, i32) {
    %c0_i32 = arith.constant 0 : i32
    %c0_i32_0 = arith.constant 0 : i32
    %c0_i32_1 = arith.constant 0 : i32
    return %c0_i32, %c0_i32_0 : i32, i32
  }
  func.func @transform_8(%arg0: i32) -> (i32, i32) {
    %c0_i32 = arith.constant 0 : i32
    %c0_i32_0 = arith.constant 0 : i32
    %c0_i32_1 = arith.constant 0 : i32
    return %c0_i32, %c0_i32_0 : i32, i32
  }
  func.func @transform_9(%arg0: i32) -> (i32, i32) {
    %c0_i32 = arith.constant 0 : i32
    %c0_i32_0 = arith.constant 0 : i32
    %c0_i32_1 = arith.constant 0 : i32
    return %c0_i32, %c0_i32_0 : i32, i32
  }
  func.func @transform_10(%arg0: i32) -> (i32, i32) {
    %c0_i32 = arith.constant 0 : i32
    %c0_i32_0 = arith.constant 0 : i32
    %c0_i32_1 = arith.constant 0 : i32
    return %c0_i32, %c0_i32_0 : i32, i32
  }
  func.func @transform_11(%arg0: i32) -> (i32, i32) {
    %c0_i32 = arith.constant 0 : i32
    %c0_i32_0 = arith.constant 0 : i32
    %c0_i32_1 = arith.constant 0 : i32
    return %c0_i32, %c0_i32_0 : i32, i32
  }
  func.func @transform_12(%arg0: i32) -> (i32, i32) {
    %c0_i32 = arith.constant 0 : i32
    %c0_i32_0 = arith.constant 0 : i32
    %c0_i32_1 = arith.constant 0 : i32
    return %c0_i32, %c0_i32_0 : i32, i32
  }
  func.func @transform_13(%arg0: i32) -> (i32, i32) {
    %c0_i32 = arith.constant 0 : i32
    %c0_i32_0 = arith.constant 0 : i32
    %c0_i32_1 = arith.constant 0 : i32
    return %c0_i32, %c0_i32_0 : i32, i32
  }
  func.func @transform_14(%arg0: i32) -> (i32, i32) {
    %c0_i32 = arith.constant 0 : i32
    %c0_i32_0 = arith.constant 0 : i32
    %c0_i32_1 = arith.constant 0 : i32
    return %c0_i32, %c0_i32_0 : i32, i32
  }
  func.func @transform_15(%arg0: i32) -> (i32, i32, i32) {
    %c0_i32 = arith.constant 0 : i32
    %c0_i32_0 = arith.constant 0 : i32
    %c0_i32_1 = arith.constant 0 : i32
    return %arg0, %c0_i32, %c0_i32_0 : i32, i32, i32
  }
  func.func @transform_16(%arg0: i32) -> (i32, i32, i32) {
    %c0_i32 = arith.constant 0 : i32
    %c0_i32_0 = arith.constant 0 : i32
    %c0_i32_1 = arith.constant 0 : i32
    return %arg0, %c0_i32, %c0_i32_0 : i32, i32, i32
  }
}

</mosaic_0001>

<llo_original>
// kernel: decoder_forward.1
$region0: #{decoder_forward.1}
  #allocation0 [shape = 'u32[]', space=smem, size = 0x4, offset = 0x4, fixed_abs, tag = 'smem constant byte address 0x4 - core index']
  #allocation1 [shape = 'u32[144,128]{1,0:T(1,128)}', space=vmem, size = 0x12000, scoped, tag = 'internal scratch']
  %s0 = inlined_call_operand.vmem [shape: f32[2,8,128], index: 0, kind: input, shape index: {}]
  %s1 = inlined_call_operand.vmem [shape: bf16[2,128,128], index: 1, kind: input, shape index: {}]
  %s2 = inlined_call_operand.vmem [shape: bf16[2,128,128], index: 2, kind: input, shape index: {}]
  %s3 = inlined_call_operand.vmem [shape: bf16[128,128], index: 3, kind: input, shape index: {}]
  %s4 = inlined_call_operand.vmem [shape: f32[1,128], index: 4, kind: input, shape index: {}]
  %s5 = inlined_call_operand.vmem [shape: bf16[2,3,128,256], index: 5, kind: input, shape index: {}]
  %s6 = inlined_call_operand.vmem [shape: f32[2,1,256], index: 6, kind: input, shape index: {}]
  %s7 = inlined_call_operand.vmem [shape: bf16[128,128], index: 7, kind: input, shape index: {}]
  %s8 = inlined_call_operand.vmem [shape: f32[1,128], index: 8, kind: input, shape index: {}]
  %s9 = inlined_call_operand.vmem [shape: bf16[128,128], index: 9, kind: input, shape index: {}]
  %s10 = inlined_call_operand.vmem [shape: f32[1,128], index: 10, kind: input, shape index: {}]
  %s11 = inlined_call_operand.vmem [shape: bf16[128,128], index: 11, kind: input, shape index: {}]
  %s12 = inlined_call_operand.vmem [shape: f32[1,128], index: 12, kind: input, shape index: {}]
  %s13 = inlined_call_operand.vmem [shape: bf16[128,128], index: 13, kind: input, shape index: {}]
  %s14 = inlined_call_operand.vmem [shape: f32[1,128], index: 14, kind: input, shape index: {}]
  %s15 = inlined_call_operand.hbm [shape: f32[2,8,128], index: 15, kind: output, shape index: {0}]
  %s16 = inlined_call_operand.hbm [shape: f32[2,8,128], index: 16, kind: output, shape index: {1}]
  %17 = xla_tuple %s15, %s16
  %s18 = sld [smem:[#allocation0]]
  $region101: #{decoder_forward.1} parent=0
    _
  %s20 = ssub.s32 1, %s18
  %s21 = scalar_select 0, %s20, %s18
  $region1: #{decoder_forward.1} parent=0
    #allocation2 [shape = 'u8[8192]{0}', space=vmem, size = 0x2000, scoped, tag = 'output window, operand 0']
    #allocation3 [shape = 's32[2]{0}', space=sflag, size = 0x8, scoped, tag = 'scoped memory for decoder_forward.1']
    #allocation4 [shape = 'u8[8192]{0}', space=vmem, size = 0x2000, scoped, tag = 'output window, operand 1']
    #allocation5 [shape = 's32[2]{0}', space=sflag, size = 0x8, scoped, tag = 'scoped memory for decoder_forward.1']
    %22 = vsyncpa [#allocation3], 0
    %s23 = scalar_lea.sflag [#allocation3], 1
    %24 = vsyncpa %s23, 0
    %25 = vsyncpa [#allocation5], 0
    %s26 = scalar_lea.sflag [#allocation5], 1
    %27 = vsyncpa %s26, 0
    loop: start=0, step=1, limit=4
    $region2: #{decoder_forward.1} parent=1 // loop_pre_header
      _
    $region3: #{decoder_forward.1} parent=1 // loop_header
      %s29 = sphi 0, %s33
      %p30 = scmp.ge.s32.totalorder %s29, 4
      %s39 = sphi 0, %s41
      %s42 = sphi 0, %s39
      %s43 = sphi 0, %s42
      %s59 = sphi 0, %s43
      %s65 = sphi 0, %s67
      %s68 = sphi 0, %s65
      %s69 = sphi 0, %s68
      %s85 = sphi 0, %s69
      %s91 = sphi 0, %s93
      %s94 = sphi 0, %s91
      %s95 = sphi 0, %s94
      %s111 = sphi 0, %s95
      %s115 = sphi 0, %s115
      %s117 = sphi 0, %s115
      %s118 = sphi 0, %s117
      %s132 = sphi 0, %s118
      %s136 = sphi 0, %s136
      %s138 = sphi 0, %s136
      %s139 = sphi 0, %s138
      %s153 = sphi 0, %s139
      %s157 = sphi 0, %s157
      %s159 = sphi 0, %s157
      %s160 = sphi 0, %s159
      %s174 = sphi 0, %s160
      %s178 = sphi 0, %s178
      %s180 = sphi 0, %s178
      %s181 = sphi 0, %s180
      %s195 = sphi 0, %s181
      %s199 = sphi 0, %s199
      %s201 = sphi 0, %s199
      %s202 = sphi 0, %s201
      %s216 = sphi 0, %s202
      %s220 = sphi 0, %s220
      %s222 = sphi 0, %s220
      %s223 = sphi 0, %s222
      %s237 = sphi 0, %s223
      %s241 = sphi 0, %s241
      %s243 = sphi 0, %s241
      %s244 = sphi 0, %s243
      %s258 = sphi 0, %s244
      %s262 = sphi 0, %s262
      %s264 = sphi 0, %s262
      %s265 = sphi 0, %s264
      %s279 = sphi 0, %s265
      %s283 = sphi 0, %s283
      %s285 = sphi 0, %s283
      %s286 = sphi 0, %s285
      %s300 = sphi 0, %s286
      %s304 = sphi 0, %s304
      %s306 = sphi 0, %s304
      %s307 = sphi 0, %s306
      %s321 = sphi 0, %s307
      %s325 = sphi 0, %s325
      %s327 = sphi 0, %s325
      %s328 = sphi 0, %s327
      %s342 = sphi 0, %s328
      %s346 = sphi 0, %s346
      %s348 = sphi 0, %s346
      %s349 = sphi 0, %s348
      %s363 = sphi 0, %s349
      %s369 = sphi 0, %s371
      %s372 = sphi 0, %s369
      %s373 = sphi 0, %s372
      %s389 = sphi 0, %s373
      %s395 = sphi 0, %s397
      %s398 = sphi 0, %s395
      %s399 = sphi 0, %s398
      %s415 = sphi 0, %s399
    $region4: #{decoder_forward.1} parent=1 // loop_header_branch
      %32 = sbr.rel (%p30) target = $region8
    $region5: #{decoder_forward.1} parent=1 // loop_body
      %s34 = ssub.s32 %s29, 1
      %s35 = ssub.s32 %s29, 2
      %s36 = sadd.s32 %s29, 1
      %s37 = ssub.s32 %s29, %s36
      %p38 = scmp.eq.s32.totalorder %s37, 0
      %s40 = sadd.s32 %s39, 1
      %s41 = scalar_select %p38, %s39, %s40
      %p44 = pneg %p38
      %p45 = scmp.eq.s32.totalorder %s29, 1
      %p46 = por %p44, %p45
      %p47 = scmp.ne.s32.totalorder %s39, %s42
      %p48 = scmp.eq.s32.totalorder %s29, 0
      %p49 = por %p47, %p48
      %p50 = scmp.ne.s32.totalorder %s39, %s42
      %p51 = scmp.eq.s32.totalorder %s34, 1
      %p52 = por %p50, %p51
      %p53 = scmp.ne.s32.totalorder %s42, %s43
      %p54 = scmp.eq.s32.totalorder %s34, 0
      %p55 = por %p53, %p54
      %p56 = scmp.ne.s32.totalorder %s42, %s43
      %p57 = scmp.eq.s32.totalorder %s35, 1
      %p58 = por %p56, %p57
      %p60 = scmp.ne.s32.totalorder %s43, %s59
      %p61 = scmp.eq.s32.totalorder %s35, 0
      %p62 = por %p60, %p61
      %s63 = ssub.s32 %s29, %s36
      %p64 = scmp.eq.s32.totalorder %s63, 0
      %s66 = sadd.s32 %s65, 1
      %s67 = scalar_select %p64, %s65, %s66
      %p70 = pneg %p64
      %p71 = scmp.eq.s32.totalorder %s29, 1
      %p72 = por %p70, %p71
      %p73 = scmp.ne.s32.totalorder %s65, %s68
      %p74 = scmp.eq.s32.totalorder %s29, 0
      %p75 = por %p73, %p74
      %p76 = scmp.ne.s32.totalorder %s65, %s68
      %p77 = scmp.eq.s32.totalorder %s34, 1
      %p78 = por %p76, %p77
      %p79 = scmp.ne.s32.totalorder %s68, %s69
      %p80 = scmp.eq.s32.totalorder %s34, 0
      %p81 = por %p79, %p80
      %p82 = scmp.ne.s32.totalorder %s68, %s69
      %p83 = scmp.eq.s32.totalorder %s35, 1
      %p84 = por %p82, %p83
      %p86 = scmp.ne.s32.totalorder %s69, %s85
      %p87 = scmp.eq.s32.totalorder %s35, 0
      %p88 = por %p86, %p87
      %s89 = ssub.s32 %s29, %s36
      %p90 = scmp.eq.s32.totalorder %s89, 0
      %s92 = sadd.s32 %s91, 1
      %s93 = scalar_select %p90, %s91, %s92
      %p96 = pneg %p90
      %p97 = scmp.eq.s32.totalorder %s29, 1
      %p98 = por %p96, %p97
      %p99 = scmp.ne.s32.totalorder %s91, %s94
      %p100 = scmp.eq.s32.totalorder %s29, 0
      %p101 = por %p99, %p100
      %p102 = scmp.ne.s32.totalorder %s91, %s94
      %p103 = scmp.eq.s32.totalorder %s34, 1
      %p104 = por %p102, %p103
      %p105 = scmp.ne.s32.totalorder %s94, %s95
      %p106 = scmp.eq.s32.totalorder %s34, 0
      %p107 = por %p105, %p106
      %p108 = scmp.ne.s32.totalorder %s94, %s95
      %p109 = scmp.eq.s32.totalorder %s35, 1
      %p110 = por %p108, %p109
      %p112 = scmp.ne.s32.totalorder %s95, %s111
      %p113 = scmp.eq.s32.totalorder %s35, 0
      %p114 = por %p112, %p113
      %s116 = sadd.s32 %s115, 1
      %p119 = scmp.eq.s32.totalorder %s29, 1
      %p120 = scmp.ne.s32.totalorder %s115, %s117
      %p121 = scmp.eq.s32.totalorder %s29, 0
      %p122 = por %p120, %p121
      %p123 = scmp.ne.s32.totalorder %s115, %s117
      %p124 = scmp.eq.s32.totalorder %s34, 1
      %p125 = por %p123, %p124
      %p126 = scmp.ne.s32.totalorder %s117, %s118
      %p127 = scmp.eq.s32.totalorder %s34, 0
      %p128 = por %p126, %p127
      %p129 = scmp.ne.s32.totalorder %s117, %s118
      %p130 = scmp.eq.s32.totalorder %s35, 1
      %p131 = por %p129, %p130
      %p133 = scmp.ne.s32.totalorder %s118, %s132
      %p134 = scmp.eq.s32.totalorder %s35, 0
      %p135 = por %p133, %p134
      %s137 = sadd.s32 %s136, 1
      %p140 = scmp.eq.s32.totalorder %s29, 1
      %p141 = scmp.ne.s32.totalorder %s136, %s138
      %p142 = scmp.eq.s32.totalorder %s29, 0
      %p143 = por %p141, %p142
      %p144 = scmp.ne.s32.totalorder %s136, %s138
      %p145 = scmp.eq.s32.totalorder %s34, 1
      %p146 = por %p144, %p145
      %p147 = scmp.ne.s32.totalorder %s138, %s139
      %p148 = scmp.eq.s32.totalorder %s34, 0
      %p149 = por %p147, %p148
      %p150 = scmp.ne.s32.totalorder %s138, %s139
      %p151 = scmp.eq.s32.totalorder %s35, 1
      %p152 = por %p150, %p151
      %p154 = scmp.ne.s32.totalorder %s139, %s153
      %p155 = scmp.eq.s32.totalorder %s35, 0
      %p156 = por %p154, %p155
      %s158 = sadd.s32 %s157, 1
      %p161 = scmp.eq.s32.totalorder %s29, 1
      %p162 = scmp.ne.s32.totalorder %s157, %s159
      %p163 = scmp.eq.s32.totalorder %s29, 0
      %p164 = por %p162, %p163
      %p165 = scmp.ne.s32.totalorder %s157, %s159
      %p166 = scmp.eq.s32.totalorder %s34, 1
      %p167 = por %p165, %p166
      %p168 = scmp.ne.s32.totalorder %s159, %s160
      %p169 = scmp.eq.s32.totalorder %s34, 0
      %p170 = por %p168, %p169
      %p171 = scmp.ne.s32.totalorder %s159, %s160
      %p172 = scmp.eq.s32.totalorder %s35, 1
      %p173 = por %p171, %p172
      %p175 = scmp.ne.s32.totalorder %s160, %s174
      %p176 = scmp.eq.s32.totalorder %s35, 0
      %p177 = por %p175, %p176
      %s179 = sadd.s32 %s178, 1
      %p182 = scmp.eq.s32.totalorder %s29, 1
      %p183 = scmp.ne.s32.totalorder %s178, %s180
      %p184 = scmp.eq.s32.totalorder %s29, 0
      %p185 = por %p183, %p184
      %p186 = scmp.ne.s32.totalorder %s178, %s180
      %p187 = scmp.eq.s32.totalorder %s34, 1
      %p188 = por %p186, %p187
      %p189 = scmp.ne.s32.totalorder %s180, %s181
      %p190 = scmp.eq.s32.totalorder %s34, 0
      %p191 = por %p189, %p190
      %p192 = scmp.ne.s32.totalorder %s180, %s181
      %p193 = scmp.eq.s32.totalorder %s35, 1
      %p194 = por %p192, %p193
      %p196 = scmp.ne.s32.totalorder %s181, %s195
      %p197 = scmp.eq.s32.totalorder %s35, 0
      %p198 = por %p196, %p197
      %s200 = sadd.s32 %s199, 1
      %p203 = scmp.eq.s32.totalorder %s29, 1
      %p204 = scmp.ne.s32.totalorder %s199, %s201
      %p205 = scmp.eq.s32.totalorder %s29, 0
      %p206 = por %p204, %p205
      %p207 = scmp.ne.s32.totalorder %s199, %s201
      %p208 = scmp.eq.s32.totalorder %s34, 1
      %p209 = por %p207, %p208
      %p210 = scmp.ne.s32.totalorder %s201, %s202
      %p211 = scmp.eq.s32.totalorder %s34, 0
      %p212 = por %p210, %p211
      %p213 = scmp.ne.s32.totalorder %s201, %s202
      %p214 = scmp.eq.s32.totalorder %s35, 1
      %p215 = por %p213, %p214
      %p217 = scmp.ne.s32.totalorder %s202, %s216
      %p218 = scmp.eq.s32.totalorder %s35, 0
      %p219 = por %p217, %p218
      %s221 = sadd.s32 %s220, 1
      %p224 = scmp.eq.s32.totalorder %s29, 1
      %p225 = scmp.ne.s32.totalorder %s220, %s222
      %p226 = scmp.eq.s32.totalorder %s29, 0
      %p227 = por %p225, %p226
      %p228 = scmp.ne.s32.totalorder %s220, %s222
      %p229 = scmp.eq.s32.totalorder %s34, 1
      %p230 = por %p228, %p229
      %p231 = scmp.ne.s32.totalorder %s222, %s223
      %p232 = scmp.eq.s32.totalorder %s34, 0
      %p233 = por %p231, %p232
      %p234 = scmp.ne.s32.totalorder %s222, %s223
      %p235 = scmp.eq.s32.totalorder %s35, 1
      %p236 = por %p234, %p235
      %p238 = scmp.ne.s32.totalorder %s223, %s237
      %p239 = scmp.eq.s32.totalorder %s35, 0
      %p240 = por %p238, %p239
      %s242 = sadd.s32 %s241, 1
      %p245 = scmp.eq.s32.totalorder %s29, 1
      %p246 = scmp.ne.s32.totalorder %s241, %s243
      %p247 = scmp.eq.s32.totalorder %s29, 0
      %p248 = por %p246, %p247
      %p249 = scmp.ne.s32.totalorder %s241, %s243
      %p250 = scmp.eq.s32.totalorder %s34, 1
      %p251 = por %p249, %p250
      %p252 = scmp.ne.s32.totalorder %s243, %s244
      %p253 = scmp.eq.s32.totalorder %s34, 0
      %p254 = por %p252, %p253
      %p255 = scmp.ne.s32.totalorder %s243, %s244
      %p256 = scmp.eq.s32.totalorder %s35, 1
      %p257 = por %p255, %p256
      %p259 = scmp.ne.s32.totalorder %s244, %s258
      %p260 = scmp.eq.s32.totalorder %s35, 0
      %p261 = por %p259, %p260
      %s263 = sadd.s32 %s262, 1
      %p266 = scmp.eq.s32.totalorder %s29, 1
      %p267 = scmp.ne.s32.totalorder %s262, %s264
      %p268 = scmp.eq.s32.totalorder %s29, 0
      %p269 = por %p267, %p268
      %p270 = scmp.ne.s32.totalorder %s262, %s264
      %p271 = scmp.eq.s32.totalorder %s34, 1
      %p272 = por %p270, %p271
      %p273 = scmp.ne.s32.totalorder %s264, %s265
      %p274 = scmp.eq.s32.totalorder %s34, 0
      %p275 = por %p273, %p274
      %p276 = scmp.ne.s32.totalorder %s264, %s265
      %p277 = scmp.eq.s32.totalorder %s35, 1
      %p278 = por %p276, %p277
      %p280 = scmp.ne.s32.totalorder %s265, %s279
      %p281 = scmp.eq.s32.totalorder %s35, 0
      %p282 = por %p280, %p281
      %s284 = sadd.s32 %s283, 1
      %p287 = scmp.eq.s32.totalorder %s29, 1
      %p288 = scmp.ne.s32.totalorder %s283, %s285
      %p289 = scmp.eq.s32.totalorder %s29, 0
      %p290 = por %p288, %p289
      %p291 = scmp.ne.s32.totalorder %s283, %s285
      %p292 = scmp.eq.s32.totalorder %s34, 1
      %p293 = por %p291, %p292
      %p294 = scmp.ne.s32.totalorder %s285, %s286
      %p295 = scmp.eq.s32.totalorder %s34, 0
      %p296 = por %p294, %p295
      %p297 = scmp.ne.s32.totalorder %s285, %s286
      %p298 = scmp.eq.s32.totalorder %s35, 1
      %p299 = por %p297, %p298
      %p301 = scmp.ne.s32.totalorder %s286, %s300
      %p302 = scmp.eq.s32.totalorder %s35, 0
      %p303 = por %p301, %p302
      %s305 = sadd.s32 %s304, 1
      %p308 = scmp.eq.s32.totalorder %s29, 1
      %p309 = scmp.ne.s32.totalorder %s304, %s306
      %p310 = scmp.eq.s32.totalorder %s29, 0
      %p311 = por %p309, %p310
      %p312 = scmp.ne.s32.totalorder %s304, %s306
      %p313 = scmp.eq.s32.totalorder %s34, 1
      %p314 = por %p312, %p313
      %p315 = scmp.ne.s32.totalorder %s306, %s307
      %p316 = scmp.eq.s32.totalorder %s34, 0
      %p317 = por %p315, %p316
      %p318 = scmp.ne.s32.totalorder %s306, %s307
      %p319 = scmp.eq.s32.totalorder %s35, 1
      %p320 = por %p318, %p319
      %p322 = scmp.ne.s32.totalorder %s307, %s321
      %p323 = scmp.eq.s32.totalorder %s35, 0
      %p324 = por %p322, %p323
      %s326 = sadd.s32 %s325, 1
      %p329 = scmp.eq.s32.totalorder %s29, 1
      %p330 = scmp.ne.s32.totalorder %s325, %s327
      %p331 = scmp.eq.s32.totalorder %s29, 0
      %p332 = por %p330, %p331
      %p333 = scmp.ne.s32.totalorder %s325, %s327
      %p334 = scmp.eq.s32.totalorder %s34, 1
      %p335 = por %p333, %p334
      %p336 = scmp.ne.s32.totalorder %s327, %s328
      %p337 = scmp.eq.s32.totalorder %s34, 0
      %p338 = por %p336, %p337
      %p339 = scmp.ne.s32.totalorder %s327, %s328
      %p340 = scmp.eq.s32.totalorder %s35, 1
      %p341 = por %p339, %p340
      %p343 = scmp.ne.s32.totalorder %s328, %s342
      %p344 = scmp.eq.s32.totalorder %s35, 0
      %p345 = por %p343, %p344
      %s347 = sadd.s32 %s346, 1
      %p350 = scmp.eq.s32.totalorder %s29, 1
      %p351 = scmp.ne.s32.totalorder %s346, %s348
      %p352 = scmp.eq.s32.totalorder %s29, 0
      %p353 = por %p351, %p352
      %p354 = scmp.ne.s32.totalorder %s346, %s348
      %p355 = scmp.eq.s32.totalorder %s34, 1
      %p356 = por %p354, %p355
      %p357 = scmp.ne.s32.totalorder %s348, %s349
      %p358 = scmp.eq.s32.totalorder %s34, 0
      %p359 = por %p357, %p358
      %p360 = scmp.ne.s32.totalorder %s348, %s349
      %p361 = scmp.eq.s32.totalorder %s35, 1
      %p362 = por %p360, %p361
      %p364 = scmp.ne.s32.totalorder %s349, %s363
      %p365 = scmp.eq.s32.totalorder %s35, 0
      %p366 = por %p364, %p365
      %s367 = ssub.s32 %s29, %s36
      %p368 = scmp.eq.s32.totalorder %s367, 0
      %s370 = sadd.s32 %s369, 1
      %s371 = scalar_select %p368, %s369, %s370
      %p374 = pneg %p368
      %p375 = scmp.eq.s32.totalorder %s29, 1
      %p376 = por %p374, %p375
      %p377 = scmp.ne.s32.totalorder %s369, %s372
      %p378 = scmp.eq.s32.totalorder %s29, 0
      %p379 = por %p377, %p378
      %p380 = scmp.ne.s32.totalorder %s369, %s372
      %p381 = scmp.eq.s32.totalorder %s34, 1
      %p382 = por %p380, %p381
      %p383 = scmp.ne.s32.totalorder %s372, %s373
      %p384 = scmp.eq.s32.totalorder %s34, 0
      %p385 = por %p383, %p384
      %p386 = scmp.ne.s32.totalorder %s372, %s373
      %p387 = scmp.eq.s32.totalorder %s35, 1
      %p388 = por %p386, %p387
      %p390 = scmp.ne.s32.totalorder %s373, %s389
      %p391 = scmp.eq.s32.totalorder %s35, 0
      %p392 = por %p390, %p391
      %s393 = ssub.s32 %s29, %s36
      %p394 = scmp.eq.s32.totalorder %s393, 0
      %s396 = sadd.s32 %s395, 1
      %s397 = scalar_select %p394, %s395, %s396
      %p400 = pneg %p394
      %p401 = scmp.eq.s32.totalorder %s29, 1
      %p402 = por %p400, %p401
      %p403 = scmp.ne.s32.totalorder %s395, %s398
      %p404 = scmp.eq.s32.totalorder %s29, 0
      %p405 = por %p403, %p404
      %p406 = scmp.ne.s32.totalorder %s395, %s398
      %p407 = scmp.eq.s32.totalorder %s34, 1
      %p408 = por %p406, %p407
      %p409 = scmp.ne.s32.totalorder %s398, %s399
      %p410 = scmp.eq.s32.totalorder %s34, 0
      %p411 = por %p409, %p410
      %p412 = scmp.ne.s32.totalorder %s398, %s399
      %p413 = scmp.eq.s32.totalorder %s35, 1
      %p414 = por %p412, %p413
      %p416 = scmp.ne.s32.totalorder %s399, %s415
      %p417 = scmp.eq.s32.totalorder %s35, 0
      %p418 = por %p416, %p417
      %p419 = scmp.le.s32.totalorder 1, %s29
      %p420 = scmp.lt.s32.totalorder %s29, 3
      %p421 = pnand %p419, %p420
      %p422 = pneg %p421
      // Predicated region
      $region9: #{decoder_forward.1} parent=5 // pred_check
        _
      $region10: #{decoder_forward.1} parent=5 // pred_check_branch
        %424 = sbr.rel (%p421) target = $region12
      $region11: #{decoder_forward.1} parent=5 // pred_region
        %s425 = ssub.s32 %s29, 1
        // Predicated region
        $region13: #{decoder_forward.1} parent=11 // pred_check
          %p426 = pneg %p128
        $region14: #{decoder_forward.1} parent=11 // pred_check_branch
          %428 = sbr.rel (%p426) target = $region16
        $region15: #{decoder_forward.1} parent=11 // pred_region
          _
        $region16: #{decoder_forward.1} parent=11 // pred_fallthru
          _
        // Predicated region
        $region17: #{decoder_forward.1} parent=11 // pred_check
          %p429 = pneg %p149
        $region18: #{decoder_forward.1} parent=11 // pred_check_branch
          %431 = sbr.rel (%p429) target = $region20
        $region19: #{decoder_forward.1} parent=11 // pred_region
          _
        $region20: #{decoder_forward.1} parent=11 // pred_fallthru
          _
        // Predicated region
        $region21: #{decoder_forward.1} parent=11 // pred_check
          %p432 = pneg %p170
        $region22: #{decoder_forward.1} parent=11 // pred_check_branch
          %434 = sbr.rel (%p432) target = $region24
        $region23: #{decoder_forward.1} parent=11 // pred_region
          _
        $region24: #{decoder_forward.1} parent=11 // pred_fallthru
          _
        // Predicated region
        $region25: #{decoder_forward.1} parent=11 // pred_check
          %p435 = pneg %p191
        $region26: #{decoder_forward.1} parent=11 // pred_check_branch
          %437 = sbr.rel (%p435) target = $region28
        $region27: #{decoder_forward.1} parent=11 // pred_region
          _
        $region28: #{decoder_forward.1} parent=11 // pred_fallthru
          _
        // Predicated region
        $region29: #{decoder_forward.1} parent=11 // pred_check
          %p438 = pneg %p212
        $region30: #{decoder_forward.1} parent=11 // pred_check_branch
          %440 = sbr.rel (%p438) target = $region32
        $region31: #{decoder_forward.1} parent=11 // pred_region
          _
        $region32: #{decoder_forward.1} parent=11 // pred_fallthru
          _
        // Predicated region
        $region33: #{decoder_forward.1} parent=11 // pred_check
          %p441 = pneg %p233
        $region34: #{decoder_forward.1} parent=11 // pred_check_branch
          %443 = sbr.rel (%p441) target = $region36
        $region35: #{decoder_forward.1} parent=11 // pred_region
          _
        $region36: #{decoder_forward.1} parent=11 // pred_fallthru
          _
        // Predicated region
        $region37: #{decoder_forward.1} parent=11 // pred_check
          %p444 = pneg %p254
        $region38: #{decoder_forward.1} parent=11 // pred_check_branch
          %446 = sbr.rel (%p444) target = $region40
        $region39: #{decoder_forward.1} parent=11 // pred_region
          _
        $region40: #{decoder_forward.1} parent=11 // pred_fallthru
          _
        // Predicated region
        $region41: #{decoder_forward.1} parent=11 // pred_check
          %p447 = pneg %p275
        $region42: #{decoder_forward.1} parent=11 // pred_check_branch
          %449 = sbr.rel (%p447) target = $region44
        $region43: #{decoder_forward.1} parent=11 // pred_region
          _
        $region44: #{decoder_forward.1} parent=11 // pred_fallthru
          _
        // Predicated region
        $region45: #{decoder_forward.1} parent=11 // pred_check
          %p450 = pneg %p296
        $region46: #{decoder_forward.1} parent=11 // pred_check_branch
          %452 = sbr.rel (%p450) target = $region48
        $region47: #{decoder_forward.1} parent=11 // pred_region
          _
        $region48: #{decoder_forward.1} parent=11 // pred_fallthru
          _
        // Predicated region
        $region49: #{decoder_forward.1} parent=11 // pred_check
          %p453 = pneg %p317
        $region50: #{decoder_forward.1} parent=11 // pred_check_branch
          %455 = sbr.rel (%p453) target = $region52
        $region51: #{decoder_forward.1} parent=11 // pred_region
          _
        $region52: #{decoder_forward.1} parent=11 // pred_fallthru
          _
        // Predicated region
        $region53: #{decoder_forward.1} parent=11 // pred_check
          %p456 = pneg %p338
        $region54: #{decoder_forward.1} parent=11 // pred_check_branch
          %458 = sbr.rel (%p456) target = $region56
        $region55: #{decoder_forward.1} parent=11 // pred_region
          _
        $region56: #{decoder_forward.1} parent=11 // pred_fallthru
          _
        // Predicated region
        $region57: #{decoder_forward.1} parent=11 // pred_check
          %p459 = pneg %p359
        $region58: #{decoder_forward.1} parent=11 // pred_check_branch
          %461 = sbr.rel (%p459) target = $region60
        $region59: #{decoder_forward.1} parent=11 // pred_region
          _
        $region60: #{decoder_forward.1} parent=11 // pred_fallthru
          _
      $region12: #{decoder_forward.1} parent=5 // pred_fallthru
        _
      %p462 = scmp.lt.s32.totalorder %s29, 2
      // Predicated region
      $region61: #{decoder_forward.1} parent=5 // pred_check
        %p463 = pneg %p462
      $region62: #{decoder_forward.1} parent=5 // pred_check_branch
        %465 = sbr.rel (%p463) target = $region64
      $region63: #{decoder_forward.1} parent=5 // pred_region
        // Predicated region
        $region65: #{decoder_forward.1} parent=63 // pred_check
          %p466 = pneg %p49
        $region66: #{decoder_forward.1} parent=63 // pred_check_branch
          %468 = sbr.rel (%p466) target = $region68
        $region67: #{decoder_forward.1} parent=63 // pred_region
          %p469 = scmp.lt.s32.totalorder %s29, 1
          %s470 = scalar_select %p469, %s29, 1
          %s471 = smul.addr %s470, 8
          %s472 = scalar_lea.vmem %s0, %s471
        $region68: #{decoder_forward.1} parent=63 // pred_fallthru
          _
        // Predicated region
        $region69: #{decoder_forward.1} parent=63 // pred_check
          %p473 = pneg %p75
        $region70: #{decoder_forward.1} parent=63 // pred_check_branch
          %475 = sbr.rel (%p473) target = $region72
        $region71: #{decoder_forward.1} parent=63 // pred_region
          %p476 = scmp.lt.s32.totalorder %s29, 1
          %s477 = scalar_select %p476, %s29, 1
          %s478 = smul.addr %s477, 16
          %s479 = smul.addr %s478, 4
          %s480 = scalar_lea.vmem %s1, %s479
        $region72: #{decoder_forward.1} parent=63 // pred_fallthru
          _
        // Predicated region
        $region73: #{decoder_forward.1} parent=63 // pred_check
          %p481 = pneg %p101
        $region74: #{decoder_forward.1} parent=63 // pred_check_branch
          %483 = sbr.rel (%p481) target = $region76
        $region75: #{decoder_forward.1} parent=63 // pred_region
          %p484 = scmp.lt.s32.totalorder %s29, 1
          %s485 = scalar_select %p484, %s29, 1
          %s486 = smul.addr %s485, 16
          %s487 = smul.addr %s486, 4
          %s488 = scalar_lea.vmem %s2, %s487
        $region76: #{decoder_forward.1} parent=63 // pred_fallthru
          _
      $region64: #{decoder_forward.1} parent=5 // pred_fallthru
        _
      %p489 = scmp.le.s32.totalorder 1, %s29
      %p490 = scmp.lt.s32.totalorder %s29, 3
      %p491 = pnand %p489, %p490
      %p492 = pneg %p491
      // Predicated region
      $region77: #{decoder_forward.1} parent=5 // pred_check
        _
      $region78: #{decoder_forward.1} parent=5 // pred_check_branch
        %494 = sbr.rel (%p491) target = $region80
      $region79: #{decoder_forward.1} parent=5 // pred_region
        %s495 = ssub.s32 %s29, 1
        %p496 = scmp.lt.s32.totalorder %s34, 1
        %s497 = scalar_select %p496, %s34, 1
        %s498 = smul.addr %s497, 8
        %s499 = scalar_lea.vmem %s0, %s498
        %p500 = pneg %p55
        %p501 = pneg %p52
        %p502 = scmp.lt.s32.totalorder %s34, 1
        %s503 = scalar_select %p502, %s34, 1
        %s504 = smul.addr %s503, 16
        %s505 = smul.addr %s504, 4
        %s506 = scalar_lea.vmem %s1, %s505
        %p507 = pneg %p81
        %p508 = pneg %p78
        %p509 = scmp.lt.s32.totalorder %s34, 1
        %s510 = scalar_select %p509, %s34, 1
        %s511 = smul.addr %s510, 16
        %s512 = smul.addr %s511, 4
        %s513 = scalar_lea.vmem %s2, %s512
        %p514 = pneg %p107
        %p515 = pneg %p104
        %p516 = pneg %p128
        %p517 = pneg %p125
        %p518 = pneg %p149
        %p519 = pneg %p146
        %p520 = pneg %p170
        %p521 = pneg %p167
        %p522 = pneg %p191
        %p523 = pneg %p188
        %p524 = pneg %p212
        %p525 = pneg %p209
        %p526 = pneg %p233
        %p527 = pneg %p230
        %p528 = pneg %p254
        %p529 = pneg %p251
        %p530 = pneg %p275
        %p531 = pneg %p272
        %p532 = pneg %p296
        %p533 = pneg %p293
        %p534 = pneg %p317
        %p535 = pneg %p314
        %p536 = pneg %p338
        %p537 = pneg %p335
        %p538 = pneg %p359
        %p539 = pneg %p356
        %p540 = pneg %p385
        %p541 = pneg %p382
        %s542 = sand.u32 %s372, 1
        %s543 = scalar_lea.sflag [#allocation3], %s542
        %s544 = sand.u32 %s372, 1
        %s545 = smul.addr %s544, 8
        %s546 = scalar_lea.vmem [#allocation2], %s545
        %p547 = pneg %p411
        %p548 = pneg %p408
        %s549 = sand.u32 %s398, 1
        %s550 = scalar_lea.sflag [#allocation5], %s549
        %s551 = sand.u32 %s398, 1
        %s552 = smul.addr %s551, 8
        %s553 = scalar_lea.vmem [#allocation4], %s552
        %p554 = scmp.lt.s32.totalorder %s34, 1
        %s555 = scalar_select %p554, %s34, 1
        %s556 = smul.addr %s555, 8
        %s557 = scalar_lea.vmem %s0, %s556
        %p558 = scmp.lt.s32.totalorder %s34, 1
        %s559 = scalar_select %p558, %s34, 1
        %s560 = smul.addr %s559, 16
        %s561 = smul.addr %s560, 4
        %s562 = scalar_lea.vmem %s1, %s561
        %p563 = scmp.lt.s32.totalorder %s34, 1
        %s564 = scalar_select %p563, %s34, 1
        %s565 = smul.addr %s564, 16
        %s566 = smul.addr %s565, 4
        %s567 = scalar_lea.vmem %s2, %s566
        %v569 = vld [vmem:[%s557] sm:$0xff]
        %v570 = vld [vmem:[%s562] sm:$0xf]
        %v571 = vld [vmem:[%s562 + $0x4] sm:$0xf]
        %v572 = vld [vmem:[%s562 + $0x8] sm:$0xf]
        %v573 = vld [vmem:[%s562 + $0xc] sm:$0xf]
        %v574 = vld [vmem:[%s562 + $0x10] sm:$0xf]
        %v575 = vld [vmem:[%s562 + $0x14] sm:$0xf]
        %v576 = vld [vmem:[%s562 + $0x18] sm:$0xf]
        %v577 = vld [vmem:[%s562 + $0x1c] sm:$0xf]
        %v578 = vld [vmem:[%s562 + $0x20] sm:$0xf]
        %v579 = vld [vmem:[%s562 + $0x24] sm:$0xf]
        %v580 = vld [vmem:[%s562 + $0x28] sm:$0xf]
        %v581 = vld [vmem:[%s562 + $0x2c] sm:$0xf]
        %v582 = vld [vmem:[%s562 + $0x30] sm:$0xf]
        %v583 = vld [vmem:[%s562 + $0x34] sm:$0xf]
        %v584 = vld [vmem:[%s562 + $0x38] sm:$0xf]
        %v585 = vld [vmem:[%s562 + $0x3c] sm:$0xf]
        %v586 = vld [vmem:[%s567] sm:$0xf]
        %v587 = vld [vmem:[%s567 + $0x4] sm:$0xf]
        %v588 = vld [vmem:[%s567 + $0x8] sm:$0xf]
        %v589 = vld [vmem:[%s567 + $0xc] sm:$0xf]
        %v590 = vld [vmem:[%s567 + $0x10] sm:$0xf]
        %v591 = vld [vmem:[%s567 + $0x14] sm:$0xf]
        %v592 = vld [vmem:[%s567 + $0x18] sm:$0xf]
        %v593 = vld [vmem:[%s567 + $0x1c] sm:$0xf]
        %v594 = vld [vmem:[%s567 + $0x20] sm:$0xf]
        %v595 = vld [vmem:[%s567 + $0x24] sm:$0xf]
        %v596 = vld [vmem:[%s567 + $0x28] sm:$0xf]
        %v597 = vld [vmem:[%s567 + $0x2c] sm:$0xf]
        %v598 = vld [vmem:[%s567 + $0x30] sm:$0xf]
        %v599 = vld [vmem:[%s567 + $0x34] sm:$0xf]
        %v600 = vld [vmem:[%s567 + $0x38] sm:$0xf]
        %v601 = vld [vmem:[%s567 + $0x3c] sm:$0xf]
        %v602 = vpack.c.bf16 %v569, %v569
        %v603 = vld [vmem:[%s3] sm:$0xf]
        %v604 = vld [vmem:[%s3 + $0x4] sm:$0xf]
        %v605 = vld [vmem:[%s3 + $0x8] sm:$0xf]
        %v606 = vld [vmem:[%s3 + $0xc] sm:$0xf]
        %v607 = vld [vmem:[%s3 + $0x10] sm:$0xf]
        %v608 = vld [vmem:[%s3 + $0x14] sm:$0xf]
        %v609 = vld [vmem:[%s3 + $0x18] sm:$0xf]
        %v610 = vld [vmem:[%s3 + $0x1c] sm:$0xf]
        %v611 = vld [vmem:[%s3 + $0x20] sm:$0xf]
        %v612 = vld [vmem:[%s3 + $0x24] sm:$0xf]
        %v613 = vld [vmem:[%s3 + $0x28] sm:$0xf]
        %v614 = vld [vmem:[%s3 + $0x2c] sm:$0xf]
        %v615 = vld [vmem:[%s3 + $0x30] sm:$0xf]
        %v616 = vld [vmem:[%s3 + $0x34] sm:$0xf]
        %v617 = vld [vmem:[%s3 + $0x38] sm:$0xf]
        %v618 = vld [vmem:[%s3 + $0x3c] sm:$0xf]
        %v619 = vld [vmem:[%s4] sm:$0x1]
        %v621 = vlaneseq
        %v622 = vshrl.u32 %v621, 7
        %v623 = vsub.s32 0, %v622
        %v624 = vrot.slane %v619, %v623
        %v642 = vunpack.c.l.b16 %v603
        %v643 = vunpack.c.l.b16 %v604
        %v644 = vunpack.c.l.b16 %v605
        %v645 = vunpack.c.l.b16 %v606
        %v646 = vunpack.c.l.b16 %v607
        %v647 = vunpack.c.l.b16 %v608
        %v648 = vunpack.c.l.b16 %v609
        %v649 = vunpack.c.l.b16 %v610
        %v650 = vunpack.c.l.b16 %v611
        %v651 = vunpack.c.l.b16 %v612
        %v652 = vunpack.c.l.b16 %v613
        %v653 = vunpack.c.l.b16 %v614
        %v654 = vunpack.c.l.b16 %v615
        %v655 = vunpack.c.l.b16 %v616
        %v656 = vunpack.c.l.b16 %v617
        %v657 = vunpack.c.l.b16 %v618
        %v658 = vpack.c.b16 %v643, %v642
        %v659 = vpack.c.b16 %v645, %v644
        %v660 = vpack.c.b16 %v647, %v646
        %v661 = vpack.c.b16 %v649, %v648
        %v662 = vpack.c.b16 %v651, %v650
        %v663 = vpack.c.b16 %v653, %v652
        %v664 = vpack.c.b16 %v655, %v654
        %v665 = vpack.c.b16 %v657, %v656
        %674 = vmatprep.subr.bf16.mxu0 0
        %675 = vmatpush1.bf16.msra.mxu0 %v658
        %676 = vmatprep.subr.bf16.mxu0 0
        %677 = vmatpush1.bf16.msra.mxu0 %v659
        %678 = vmatprep.subr.bf16.mxu0 0
        %679 = vmatpush1.bf16.msra.mxu0 %v660
        %680 = vmatprep.subr.bf16.mxu0 0
        %681 = vmatpush1.bf16.msra.mxu0 %v661
        %682 = vmatprep.subr.bf16.mxu0 0
        %683 = vmatpush1.bf16.msra.mxu0 %v662
        %684 = vmatprep.subr.bf16.mxu0 0
        %685 = vmatpush1.bf16.msra.mxu0 %v663
        %686 = vmatprep.subr.bf16.mxu0 0
        %687 = vmatpush1.bf16.msra.mxu0 %v664
        %688 = vmatprep.subr.bf16.mxu0 0
        %689 = vmatpush1.bf16.msra.mxu0 %v665
        %690 = vmatprep.subr.bf16.mxu0 0
        %691 = vmatpush1.bf16.msra.mxu0 0
        %692 = vmatprep.subr.bf16.mxu0 0
        %693 = vmatpush1.bf16.msra.mxu0 0
        %694 = vmatprep.subr.bf16.mxu0 0
        %695 = vmatpush1.bf16.msra.mxu0 0
        %696 = vmatprep.subr.bf16.mxu0 0
        %697 = vmatpush1.bf16.msra.mxu0 0
        %698 = vmatprep.subr.bf16.mxu0 0
        %699 = vmatpush1.bf16.msra.mxu0 0
        %700 = vmatprep.subr.bf16.mxu0 0
        %701 = vmatpush1.bf16.msra.mxu0 0
        %702 = vmatprep.subr.bf16.mxu0 0
        %703 = vmatpush1.bf16.msra.mxu0 0
        %704 = vmatprep.subr.bf16.mxu0 0
        %705 = vmatpush1.bf16.msra.mxu0 0
        %706 = vmatprep.mubr.bf16.mxu0 0
        %707 = vmatmul.mubr.bf16.gmra.mrb[0].mxu0 %v602
        %v708 = vpop.f32.mrb[0].mxu0
        %v709 = vadd.f32 %v624, %v708
        %v710 = vpop.f32.mrb[0].mxu0
        %v711 = vpop.f32.mrb[0].mxu0
        %v712 = vpop.f32.mrb[0].mxu0
        %713 = vdwg.mxu0
        %v714 = vlaneseq
        %v715 = vshrl.u32 %v714, 7
        %vm716 = vcmp.lt.s32.totalorder %v715, 0
        %v717 = vsub.s32 0, %v715
        %v718 = vsel %vm716, %v717, %v715
        %v719 = vshrl.u32 %v718, 3
        %v720 = vand.u32 %v718, 7
        %v721 = vsub.s32 0, %v720
        %v722 = vsel %vm716, %v721, %v720
        %vm723 = vcmp.ne.s32.totalorder %v722, 0
        %vm724 = vcmp.lt.s32.totalorder %v722, 0
        %vm725 = vmand %vm724, %vm723
        %v726 = vadd.s32 %v722, 8
        %v727 = vsel %vm725, %v726, %v722
        %v728 = vlaneseq
        %v729 = vand.u32 %v728, 127
        %vm730 = vcmp.lt.s32.totalorder %v729, 8
        %v731 = vld [vmem:[%s6] sm:$0x3]
        %vm732 = vcmp.ge.s32.totalorder %v727, 2
        %v733 = vrot.slane %v709, 6
        %v734 = vsel %vm732, %v733, 0.0
        %v735 = vpack.c.bf16 %v734, %v734
        %v736 = vld [vmem:[%s5] sm:$0xff]
        %v737 = vld [vmem:[%s5 + $0x8] sm:$0xff]
        %v738 = vld [vmem:[%s5 + $0x10] sm:$0xff]
        %v739 = vld [vmem:[%s5 + $0x18] sm:$0xff]
        %v740 = vld [vmem:[%s5 + $0x20] sm:$0xff]
        %v741 = vld [vmem:[%s5 + $0x28] sm:$0xff]
        %v742 = vld [vmem:[%s5 + $0x30] sm:$0xff]
        %v743 = vld [vmem:[%s5 + $0x38] sm:$0xff]
        %v744 = vld [vmem:[%s5 + $0x40] sm:$0xff]
        %v745 = vld [vmem:[%s5 + $0x48] sm:$0xff]
        %v746 = vld [vmem:[%s5 + $0x50] sm:$0xff]
        %v747 = vld [vmem:[%s5 + $0x58] sm:$0xff]
        %v748 = vld [vmem:[%s5 + $0x60] sm:$0xff]
        %v749 = vld [vmem:[%s5 + $0x68] sm:$0xff]
        %v750 = vld [vmem:[%s5 + $0x70] sm:$0xff]
        %v751 = vld [vmem:[%s5 + $0x78] sm:$0xff]
        %v768 = vunpack.c.l.b16 %v736
        %v769 = vunpack.c.h.b16 %v736
        %v770 = vunpack.c.l.b16 %v737
        %v771 = vunpack.c.h.b16 %v737
        %v772 = vunpack.c.l.b16 %v738
        %v773 = vunpack.c.h.b16 %v738
        %v774 = vunpack.c.l.b16 %v739
        %v775 = vunpack.c.h.b16 %v739
        %v776 = vunpack.c.l.b16 %v740
        %v777 = vunpack.c.h.b16 %v740
        %v778 = vunpack.c.l.b16 %v741
        %v779 = vunpack.c.h.b16 %v741
        %v780 = vunpack.c.l.b16 %v742
        %v781 = vunpack.c.h.b16 %v742
        %v782 = vunpack.c.l.b16 %v743
        %v783 = vunpack.c.h.b16 %v743
        %v784 = vunpack.c.l.b16 %v744
        %v785 = vunpack.c.h.b16 %v744
        %v786 = vunpack.c.l.b16 %v745
        %v787 = vunpack.c.h.b16 %v745
        %v788 = vunpack.c.l.b16 %v746
        %v789 = vunpack.c.h.b16 %v746
        %v790 = vunpack.c.l.b16 %v747
        %v791 = vunpack.c.h.b16 %v747
        %v792 = vunpack.c.l.b16 %v748
        %v793 = vunpack.c.h.b16 %v748
        %v794 = vunpack.c.l.b16 %v749
        %v795 = vunpack.c.h.b16 %v749
        %v796 = vunpack.c.l.b16 %v750
        %v797 = vunpack.c.h.b16 %v750
        %v798 = vunpack.c.l.b16 %v751
        %v799 = vunpack.c.h.b16 %v751
        %v800 = vpack.c.b16 %v770, %v768
        %v801 = vpack.c.b16 %v771, %v769
        %v802 = vpack.c.b16 %v774, %v772
        %v803 = vpack.c.b16 %v775, %v773
        %v804 = vpack.c.b16 %v778, %v776
        %v805 = vpack.c.b16 %v779, %v777
        %v806 = vpack.c.b16 %v782, %v780
        %v807 = vpack.c.b16 %v783, %v781
        %v808 = vpack.c.b16 %v786, %v784
        %v809 = vpack.c.b16 %v787, %v785
        %v810 = vpack.c.b16 %v790, %v788
        %v811 = vpack.c.b16 %v791, %v789
        %v812 = vpack.c.b16 %v794, %v792
        %v813 = vpack.c.b16 %v795, %v793
        %v814 = vpack.c.b16 %v798, %v796
        %v815 = vpack.c.b16 %v799, %v797
        %832 = vmatprep.subr.bf16.mxu0 %v801
        %833 = vmatpush1.bf16.msra.mxu0 %v800
        %834 = vmatprep.subr.bf16.mxu0 %v803
        %835 = vmatpush1.bf16.msra.mxu0 %v802
        %836 = vmatprep.subr.bf16.mxu0 %v805
        %837 = vmatpush1.bf16.msra.mxu0 %v804
        %838 = vmatprep.subr.bf16.mxu0 %v807
        %839 = vmatpush1.bf16.msra.mxu0 %v806
        %840 = vmatprep.subr.bf16.mxu0 %v809
        %841 = vmatpush1.bf16.msra.mxu0 %v808
        %842 = vmatprep.subr.bf16.mxu0 %v811
        %843 = vmatpush1.bf16.msra.mxu0 %v810
        %844 = vmatprep.subr.bf16.mxu0 %v813
        %845 = vmatpush1.bf16.msra.mxu0 %v812
        %846 = vmatprep.subr.bf16.mxu0 %v815
        %847 = vmatpush1.bf16.msra.mxu0 %v814
        %848 = vmatprep.subr.bf16.mxu0 0
        %849 = vmatpush1.bf16.msra.mxu0 0
        %850 = vmatprep.subr.bf16.mxu0 0
        %851 = vmatpush1.bf16.msra.mxu0 0
        %852 = vmatprep.subr.bf16.mxu0 0
        %853 = vmatpush1.bf16.msra.mxu0 0
        %854 = vmatprep.subr.bf16.mxu0 0
        %855 = vmatpush1.bf16.msra.mxu0 0
        %856 = vmatprep.subr.bf16.mxu0 0
        %857 = vmatpush1.bf16.msra.mxu0 0
        %858 = vmatprep.subr.bf16.mxu0 0
        %859 = vmatpush1.bf16.msra.mxu0 0
        %860 = vmatprep.subr.bf16.mxu0 0
        %861 = vmatpush1.bf16.msra.mxu0 0
        %862 = vmatprep.subr.bf16.mxu0 0
        %863 = vmatpush1.bf16.msra.mxu0 0
        %864 = vmatprep.mubr.bf16.mxu0 0
        %865 = vmatmul.mubr.bf16.gmra.mrb[0].mxu0 %v735
        %v866 = vpop.f32.mrb[0].mxu0
        %v867 = vadd.f32 0.0, %v866
        %v868 = vpop.f32.mrb[0].mxu0
        %v869 = vadd.f32 0.0, %v868
        %v870 = vpop.f32.mrb[0].mxu0
        %v871 = vpop.f32.mrb[0].mxu0
        %872 = vdwg.mxu0
        %v874 = vlaneseq
        %v875 = vshrl.u32 %v874, 7
        %v876 = vsub.s32 0, %v875
        %v877 = vrot.slane %v731, %v876
        %v878 = vlaneseq
        %v879 = vshrl.u32 %v878, 7
        %v880 = vsub.s32 1, %v879
        %v881 = vrot.slane %v731, %v880
        %v884 = vadd.f32 %v877, %v867
        %v885 = vadd.f32 %v881, %v869
        %vm886 = vcmp.ge.s32.totalorder %v727, 1
        %v887 = vrot.slane %v709, 7
        %v888 = vsel %vm886, %v887, 0.0
        %v889 = vpack.c.bf16 %v888, %v888
        %s890 = scalar_lea.vmem %s5, 128
        %v891 = vld [vmem:[%s890] sm:$0xff]
        %v892 = vld [vmem:[%s890 + $0x8] sm:$0xff]
        %v893 = vld [vmem:[%s890 + $0x10] sm:$0xff]
        %v894 = vld [vmem:[%s890 + $0x18] sm:$0xff]
        %v895 = vld [vmem:[%s890 + $0x20] sm:$0xff]
        %v896 = vld [vmem:[%s890 + $0x28] sm:$0xff]
        %v897 = vld [vmem:[%s890 + $0x30] sm:$0xff]
        %v898 = vld [vmem:[%s890 + $0x38] sm:$0xff]
        %v899 = vld [vmem:[%s890 + $0x40] sm:$0xff]
        %v900 = vld [vmem:[%s890 + $0x48] sm:$0xff]
        %v901 = vld [vmem:[%s890 + $0x50] sm:$0xff]
        %v902 = vld [vmem:[%s890 + $0x58] sm:$0xff]
        %v903 = vld [vmem:[%s890 + $0x60] sm:$0xff]
        %v904 = vld [vmem:[%s890 + $0x68] sm:$0xff]
        %v905 = vld [vmem:[%s890 + $0x70] sm:$0xff]
        %v906 = vld [vmem:[%s890 + $0x78] sm:$0xff]
        %v923 = vunpack.c.l.b16 %v891
        %v924 = vunpack.c.h.b16 %v891
        %v925 = vunpack.c.l.b16 %v892
        %v926 = vunpack.c.h.b16 %v892
        %v927 = vunpack.c.l.b16 %v893
        %v928 = vunpack.c.h.b16 %v893
        %v929 = vunpack.c.l.b16 %v894
        %v930 = vunpack.c.h.b16 %v894
        %v931 = vunpack.c.l.b16 %v895
        %v932 = vunpack.c.h.b16 %v895
        %v933 = vunpack.c.l.b16 %v896
        %v934 = vunpack.c.h.b16 %v896
        %v935 = vunpack.c.l.b16 %v897
        %v936 = vunpack.c.h.b16 %v897
        %v937 = vunpack.c.l.b16 %v898
        %v938 = vunpack.c.h.b16 %v898
        %v939 = vunpack.c.l.b16 %v899
        %v940 = vunpack.c.h.b16 %v899
        %v941 = vunpack.c.l.b16 %v900
        %v942 = vunpack.c.h.b16 %v900
        %v943 = vunpack.c.l.b16 %v901
        %v944 = vunpack.c.h.b16 %v901
        %v945 = vunpack.c.l.b16 %v902
        %v946 = vunpack.c.h.b16 %v902
        %v947 = vunpack.c.l.b16 %v903
        %v948 = vunpack.c.h.b16 %v903
        %v949 = vunpack.c.l.b16 %v904
        %v950 = vunpack.c.h.b16 %v904
        %v951 = vunpack.c.l.b16 %v905
        %v952 = vunpack.c.h.b16 %v905
        %v953 = vunpack.c.l.b16 %v906
        %v954 = vunpack.c.h.b16 %v906
        %v955 = vpack.c.b16 %v925, %v923
        %v956 = vpack.c.b16 %v926, %v924
        %v957 = vpack.c.b16 %v929, %v927
        %v958 = vpack.c.b16 %v930, %v928
        %v959 = vpack.c.b16 %v933, %v931
        %v960 = vpack.c.b16 %v934, %v932
        %v961 = vpack.c.b16 %v937, %v935
        %v962 = vpack.c.b16 %v938, %v936
        %v963 = vpack.c.b16 %v941, %v939
        %v964 = vpack.c.b16 %v942, %v940
        %v965 = vpack.c.b16 %v945, %v943
        %v966 = vpack.c.b16 %v946, %v944
        %v967 = vpack.c.b16 %v949, %v947
        %v968 = vpack.c.b16 %v950, %v948
        %v969 = vpack.c.b16 %v953, %v951
        %v970 = vpack.c.b16 %v954, %v952
        %987 = vmatprep.subr.bf16.mxu0 %v956
        %988 = vmatpush1.bf16.msra.mxu0 %v955
        %989 = vmatprep.subr.bf16.mxu0 %v958
        %990 = vmatpush1.bf16.msra.mxu0 %v957
        %991 = vmatprep.subr.bf16.mxu0 %v960
        %992 = vmatpush1.bf16.msra.mxu0 %v959
        %993 = vmatprep.subr.bf16.mxu0 %v962
        %994 = vmatpush1.bf16.msra.mxu0 %v961
        %995 = vmatprep.subr.bf16.mxu0 %v964
        %996 = vmatpush1.bf16.msra.mxu0 %v963
        %997 = vmatprep.subr.bf16.mxu0 %v966
        %998 = vmatpush1.bf16.msra.mxu0 %v965
        %999 = vmatprep.subr.bf16.mxu0 %v968
        %1000 = vmatpush1.bf16.msra.mxu0 %v967
        %1001 = vmatprep.subr.bf16.mxu0 %v970
        %1002 = vmatpush1.bf16.msra.mxu0 %v969
        %1003 = vmatprep.subr.bf16.mxu0 0
        %1004 = vmatpush1.bf16.msra.mxu0 0
        %1005 = vmatprep.subr.bf16.mxu0 0
        %1006 = vmatpush1.bf16.msra.mxu0 0
        %1007 = vmatprep.subr.bf16.mxu0 0
        %1008 = vmatpush1.bf16.msra.mxu0 0
        %1009 = vmatprep.subr.bf16.mxu0 0
        %1010 = vmatpush1.bf16.msra.mxu0 0
        %1011 = vmatprep.subr.bf16.mxu0 0
        %1012 = vmatpush1.bf16.msra.mxu0 0
        %1013 = vmatprep.subr.bf16.mxu0 0
        %1014 = vmatpush1.bf16.msra.mxu0 0
        %1015 = vmatprep.subr.bf16.mxu0 0
        %1016 = vmatpush1.bf16.msra.mxu0 0
        %1017 = vmatprep.subr.bf16.mxu0 0
        %1018 = vmatpush1.bf16.msra.mxu0 0
        %1019 = vmatprep.mubr.bf16.mxu0 0
        %1020 = vmatmul.mubr.bf16.gmra.mrb[0].mxu0 %v889
        %v1021 = vpop.f32.mrb[0].mxu0
        %v1022 = vadd.f32 0.0, %v1021
        %v1023 = vpop.f32.mrb[0].mxu0
        %v1024 = vadd.f32 0.0, %v1023
        %v1025 = vpop.f32.mrb[0].mxu0
        %v1026 = vpop.f32.mrb[0].mxu0
        %1027 = vdwg.mxu0
        %v1028 = vadd.f32 %v884, %v1022
        %v1029 = vadd.f32 %v885, %v1024
        %v1030 = vpack.c.bf16 %v709, %v709
        %s1031 = scalar_lea.vmem %s5, 256
        %v1032 = vld [vmem:[%s1031] sm:$0xff]
        %v1033 = vld [vmem:[%s1031 + $0x8] sm:$0xff]
        %v1034 = vld [vmem:[%s1031 + $0x10] sm:$0xff]
        %v1035 = vld [vmem:[%s1031 + $0x18] sm:$0xff]
        %v1036 = vld [vmem:[%s1031 + $0x20] sm:$0xff]
        %v1037 = vld [vmem:[%s1031 + $0x28] sm:$0xff]
        %v1038 = vld [vmem:[%s1031 + $0x30] sm:$0xff]
        %v1039 = vld [vmem:[%s1031 + $0x38] sm:$0xff]
        %v1040 = vld [vmem:[%s1031 + $0x40] sm:$0xff]
        %v1041 = vld [vmem:[%s1031 + $0x48] sm:$0xff]
        %v1042 = vld [vmem:[%s1031 + $0x50] sm:$0xff]
        %v1043 = vld [vmem:[%s1031 + $0x58] sm:$0xff]
        %v1044 = vld [vmem:[%s1031 + $0x60] sm:$0xff]
        %v1045 = vld [vmem:[%s1031 + $0x68] sm:$0xff]
        %v1046 = vld [vmem:[%s1031 + $0x70] sm:$0xff]
        %v1047 = vld [vmem:[%s1031 + $0x78] sm:$0xff]
        %v1064 = vunpack.c.l.b16 %v1032
        %v1065 = vunpack.c.h.b16 %v1032
        %v1066 = vunpack.c.l.b16 %v1033
        %v1067 = vunpack.c.h.b16 %v1033
        %v1068 = vunpack.c.l.b16 %v1034
        %v1069 = vunpack.c.h.b16 %v1034
        %v1070 = vunpack.c.l.b16 %v1035
        %v1071 = vunpack.c.h.b16 %v1035
        %v1072 = vunpack.c.l.b16 %v1036
        %v1073 = vunpack.c.h.b16 %v1036
        %v1074 = vunpack.c.l.b16 %v1037
        %v1075 = vunpack.c.h.b16 %v1037
        %v1076 = vunpack.c.l.b16 %v1038
        %v1077 = vunpack.c.h.b16 %v1038
        %v1078 = vunpack.c.l.b16 %v1039
        %v1079 = vunpack.c.h.b16 %v1039
        %v1080 = vunpack.c.l.b16 %v1040
        %v1081 = vunpack.c.h.b16 %v1040
        %v1082 = vunpack.c.l.b16 %v1041
        %v1083 = vunpack.c.h.b16 %v1041
        %v1084 = vunpack.c.l.b16 %v1042
        %v1085 = vunpack.c.h.b16 %v1042
        %v1086 = vunpack.c.l.b16 %v1043
        %v1087 = vunpack.c.h.b16 %v1043
        %v1088 = vunpack.c.l.b16 %v1044
        %v1089 = vunpack.c.h.b16 %v1044
        %v1090 = vunpack.c.l.b16 %v1045
        %v1091 = vunpack.c.h.b16 %v1045
        %v1092 = vunpack.c.l.b16 %v1046
        %v1093 = vunpack.c.h.b16 %v1046
        %v1094 = vunpack.c.l.b16 %v1047
        %v1095 = vunpack.c.h.b16 %v1047
        %v1096 = vpack.c.b16 %v1066, %v1064
        %v1097 = vpack.c.b16 %v1067, %v1065
        %v1098 = vpack.c.b16 %v1070, %v1068
        %v1099 = vpack.c.b16 %v1071, %v1069
        %v1100 = vpack.c.b16 %v1074, %v1072
        %v1101 = vpack.c.b16 %v1075, %v1073
        %v1102 = vpack.c.b16 %v1078, %v1076
        %v1103 = vpack.c.b16 %v1079, %v1077
        %v1104 = vpack.c.b16 %v1082, %v1080
        %v1105 = vpack.c.b16 %v1083, %v1081
        %v1106 = vpack.c.b16 %v1086, %v1084
        %v1107 = vpack.c.b16 %v1087, %v1085
        %v1108 = vpack.c.b16 %v1090, %v1088
        %v1109 = vpack.c.b16 %v1091, %v1089
        %v1110 = vpack.c.b16 %v1094, %v1092
        %v1111 = vpack.c.b16 %v1095, %v1093
        %1128 = vmatprep.subr.bf16.mxu0 %v1097
        %1129 = vmatpush1.bf16.msra.mxu0 %v1096
        %1130 = vmatprep.subr.bf16.mxu0 %v1099
        %1131 = vmatpush1.bf16.msra.mxu0 %v1098
        %1132 = vmatprep.subr.bf16.mxu0 %v1101
        %1133 = vmatpush1.bf16.msra.mxu0 %v1100
        %1134 = vmatprep.subr.bf16.mxu0 %v1103
        %1135 = vmatpush1.bf16.msra.mxu0 %v1102
        %1136 = vmatprep.subr.bf16.mxu0 %v1105
        %1137 = vmatpush1.bf16.msra.mxu0 %v1104
        %1138 = vmatprep.subr.bf16.mxu0 %v1107
        %1139 = vmatpush1.bf16.msra.mxu0 %v1106
        %1140 = vmatprep.subr.bf16.mxu0 %v1109
        %1141 = vmatpush1.bf16.msra.mxu0 %v1108
        %1142 = vmatprep.subr.bf16.mxu0 %v1111
        %1143 = vmatpush1.bf16.msra.mxu0 %v1110
        %1144 = vmatprep.subr.bf16.mxu0 0
        %1145 = vmatpush1.bf16.msra.mxu0 0
        %1146 = vmatprep.subr.bf16.mxu0 0
        %1147 = vmatpush1.bf16.msra.mxu0 0
        %1148 = vmatprep.subr.bf16.mxu0 0
        %1149 = vmatpush1.bf16.msra.mxu0 0
        %1150 = vmatprep.subr.bf16.mxu0 0
        %1151 = vmatpush1.bf16.msra.mxu0 0
        %1152 = vmatprep.subr.bf16.mxu0 0
        %1153 = vmatpush1.bf16.msra.mxu0 0
        %1154 = vmatprep.subr.bf16.mxu0 0
        %1155 = vmatpush1.bf16.msra.mxu0 0
        %1156 = vmatprep.subr.bf16.mxu0 0
        %1157 = vmatpush1.bf16.msra.mxu0 0
        %1158 = vmatprep.subr.bf16.mxu0 0
        %1159 = vmatpush1.bf16.msra.mxu0 0
        %1160 = vmatprep.mubr.bf16.mxu0 0
        %1161 = vmatmul.mubr.bf16.gmra.mrb[0].mxu0 %v1030
        %v1162 = vpop.f32.mrb[0].mxu0
        %v1163 = vadd.f32 0.0, %v1162
        %v1164 = vpop.f32.mrb[0].mxu0
        %v1165 = vadd.f32 0.0, %v1164
        %v1166 = vpop.f32.mrb[0].mxu0
        %v1167 = vpop.f32.mrb[0].mxu0
        %1168 = vdwg.mxu0
        %v1169 = vadd.f32 %v1028, %v1163
        %v1170 = vadd.f32 %v1029, %v1165
        %v1171 = vxor.u32 %v1170, 2147483648
        %v1172 = vmul.f32 %v1171, 1.442695
        %v1173 = vpow.pop %v1172
        %v1174 = vadd.f32 %v1173, 1.0
        %v1175 = vrcp.pop %v1174
        %v1176 = vmul.f32 1.0, %v1175
        %v1177 = vmul.f32 %v1169, %v1176
        %v1178 = vpack.c.bf16 %v1177, %v1177
        %v1179 = vld [vmem:[%s7] sm:$0xf]
        %v1180 = vld [vmem:[%s7 + $0x4] sm:$0xf]
        %v1181 = vld [vmem:[%s7 + $0x8] sm:$0xf]
        %v1182 = vld [vmem:[%s7 + $0xc] sm:$0xf]
        %v1183 = vld [vmem:[%s7 + $0x10] sm:$0xf]
        %v1184 = vld [vmem:[%s7 + $0x14] sm:$0xf]
        %v1185 = vld [vmem:[%s7 + $0x18] sm:$0xf]
        %v1186 = vld [vmem:[%s7 + $0x1c] sm:$0xf]
        %v1187 = vld [vmem:[%s7 + $0x20] sm:$0xf]
        %v1188 = vld [vmem:[%s7 + $0x24] sm:$0xf]
        %v1189 = vld [vmem:[%s7 + $0x28] sm:$0xf]
        %v1190 = vld [vmem:[%s7 + $0x2c] sm:$0xf]
        %v1191 = vld [vmem:[%s7 + $0x30] sm:$0xf]
        %v1192 = vld [vmem:[%s7 + $0x34] sm:$0xf]
        %v1193 = vld [vmem:[%s7 + $0x38] sm:$0xf]
        %v1194 = vld [vmem:[%s7 + $0x3c] sm:$0xf]
        %v1195 = vld [vmem:[%s8] sm:$0x1]
        %v1197 = vlaneseq
        %v1198 = vshrl.u32 %v1197, 7
        %v1199 = vsub.s32 0, %v1198
        %v1200 = vrot.slane %v1195, %v1199
        %v1218 = vunpack.c.l.b16 %v1179
        %v1219 = vunpack.c.l.b16 %v1180
        %v1220 = vunpack.c.l.b16 %v1181
        %v1221 = vunpack.c.l.b16 %v1182
        %v1222 = vunpack.c.l.b16 %v1183
        %v1223 = vunpack.c.l.b16 %v1184
        %v1224 = vunpack.c.l.b16 %v1185
        %v1225 = vunpack.c.l.b16 %v1186
        %v1226 = vunpack.c.l.b16 %v1187
        %v1227 = vunpack.c.l.b16 %v1188
        %v1228 = vunpack.c.l.b16 %v1189
        %v1229 = vunpack.c.l.b16 %v1190
        %v1230 = vunpack.c.l.b16 %v1191
        %v1231 = vunpack.c.l.b16 %v1192
        %v1232 = vunpack.c.l.b16 %v1193
        %v1233 = vunpack.c.l.b16 %v1194
        %v1234 = vpack.c.b16 %v1219, %v1218
        %v1235 = vpack.c.b16 %v1221, %v1220
        %v1236 = vpack.c.b16 %v1223, %v1222
        %v1237 = vpack.c.b16 %v1225, %v1224
        %v1238 = vpack.c.b16 %v1227, %v1226
        %v1239 = vpack.c.b16 %v1229, %v1228
        %v1240 = vpack.c.b16 %v1231, %v1230
        %v1241 = vpack.c.b16 %v1233, %v1232
        %1250 = vmatprep.subr.bf16.mxu0 0
        %1251 = vmatpush1.bf16.msra.mxu0 %v1234
        %1252 = vmatprep.subr.bf16.mxu0 0
        %1253 = vmatpush1.bf16.msra.mxu0 %v1235
        %1254 = vmatprep.subr.bf16.mxu0 0
        %1255 = vmatpush1.bf16.msra.mxu0 %v1236
        %1256 = vmatprep.subr.bf16.mxu0 0
        %1257 = vmatpush1.bf16.msra.mxu0 %v1237
        %1258 = vmatprep.subr.bf16.mxu0 0
        %1259 = vmatpush1.bf16.msra.mxu0 %v1238
        %1260 = vmatprep.subr.bf16.mxu0 0
        %1261 = vmatpush1.bf16.msra.mxu0 %v1239
        %1262 = vmatprep.subr.bf16.mxu0 0
        %1263 = vmatpush1.bf16.msra.mxu0 %v1240
        %1264 = vmatprep.subr.bf16.mxu0 0
        %1265 = vmatpush1.bf16.msra.mxu0 %v1241
        %1266 = vmatprep.subr.bf16.mxu0 0
        %1267 = vmatpush1.bf16.msra.mxu0 0
        %1268 = vmatprep.subr.bf16.mxu0 0
        %1269 = vmatpush1.bf16.msra.mxu0 0
        %1270 = vmatprep.subr.bf16.mxu0 0
        %1271 = vmatpush1.bf16.msra.mxu0 0
        %1272 = vmatprep.subr.bf16.mxu0 0
        %1273 = vmatpush1.bf16.msra.mxu0 0
        %1274 = vmatprep.subr.bf16.mxu0 0
        %1275 = vmatpush1.bf16.msra.mxu0 0
        %1276 = vmatprep.subr.bf16.mxu0 0
        %1277 = vmatpush1.bf16.msra.mxu0 0
        %1278 = vmatprep.subr.bf16.mxu0 0
        %1279 = vmatpush1.bf16.msra.mxu0 0
        %1280 = vmatprep.subr.bf16.mxu0 0
        %1281 = vmatpush1.bf16.msra.mxu0 0
        %1282 = vmatprep.mubr.bf16.mxu0 0
        %1283 = vmatmul.mubr.bf16.gmra.mrb[0].mxu0 %v1178
        %v1284 = vpop.f32.mrb[0].mxu0
        %v1285 = vadd.f32 %v1200, %v1284
        %v1286 = vpop.f32.mrb[0].mxu0
        %v1287 = vpop.f32.mrb[0].mxu0
        %v1288 = vpop.f32.mrb[0].mxu0
        %1289 = vdwg.mxu0
        %v1290 = vadd.f32 %v1285, %v569
        %v1291 = vmul.f32 %v1290, 0.70710677
        %v1292 = vpack.c.bf16 %v1291, %v1291
        %v1309 = vunpack.c.l.b16 %v570
        %v1310 = vunpack.c.l.b16 %v571
        %v1311 = vunpack.c.l.b16 %v572
        %v1312 = vunpack.c.l.b16 %v573
        %v1313 = vunpack.c.l.b16 %v574
        %v1314 = vunpack.c.l.b16 %v575
        %v1315 = vunpack.c.l.b16 %v576
        %v1316 = vunpack.c.l.b16 %v577
        %v1317 = vunpack.c.l.b16 %v578
        %v1318 = vunpack.c.l.b16 %v579
        %v1319 = vunpack.c.l.b16 %v580
        %v1320 = vunpack.c.l.b16 %v581
        %v1321 = vunpack.c.l.b16 %v582
        %v1322 = vunpack.c.l.b16 %v583
        %v1323 = vunpack.c.l.b16 %v584
        %v1324 = vunpack.c.l.b16 %v585
        %v1325 = vpack.c.b16 %v1310, %v1309
        %v1326 = vpack.c.b16 %v1312, %v1311
        %v1327 = vpack.c.b16 %v1314, %v1313
        %v1328 = vpack.c.b16 %v1316, %v1315
        %v1329 = vpack.c.b16 %v1318, %v1317
        %v1330 = vpack.c.b16 %v1320, %v1319
        %v1331 = vpack.c.b16 %v1322, %v1321
        %v1332 = vpack.c.b16 %v1324, %v1323
        %1341 = vmatprep.subr.bf16.mxu0 0
        %1342 = vmatpush1.bf16.msra.mxu0 %v1325
        %1343 = vmatprep.subr.bf16.mxu0 0
        %1344 = vmatpush1.bf16.msra.mxu0 %v1326
        %1345 = vmatprep.subr.bf16.mxu0 0
        %1346 = vmatpush1.bf16.msra.mxu0 %v1327
        %1347 = vmatprep.subr.bf16.mxu0 0
        %1348 = vmatpush1.bf16.msra.mxu0 %v1328
        %1349 = vmatprep.subr.bf16.mxu0 0
        %1350 = vmatpush1.bf16.msra.mxu0 %v1329
        %1351 = vmatprep.subr.bf16.mxu0 0
        %1352 = vmatpush1.bf16.msra.mxu0 %v1330
        %1353 = vmatprep.subr.bf16.mxu0 0
        %1354 = vmatpush1.bf16.msra.mxu0 %v1331
        %1355 = vmatprep.subr.bf16.mxu0 0
        %1356 = vmatpush1.bf16.msra.mxu0 %v1332
        %1357 = vmatprep.subr.bf16.mxu0 0
        %1358 = vmatpush1.bf16.msra.mxu0 0
        %1359 = vmatprep.subr.bf16.mxu0 0
        %1360 = vmatpush1.bf16.msra.mxu0 0
        %1361 = vmatprep.subr.bf16.mxu0 0
        %1362 = vmatpush1.bf16.msra.mxu0 0
        %1363 = vmatprep.subr.bf16.mxu0 0
        %1364 = vmatpush1.bf16.msra.mxu0 0
        %1365 = vmatprep.subr.bf16.mxu0 0
        %1366 = vmatpush1.bf16.msra.mxu0 0
        %1367 = vmatprep.subr.bf16.mxu0 0
        %1368 = vmatpush1.bf16.msra.mxu0 0
        %1369 = vmatprep.subr.bf16.mxu0 0
        %1370 = vmatpush1.bf16.msra.mxu0 0
        %1371 = vmatprep.subr.bf16.mxu0 0
        %1372 = vmatpush1.bf16.msra.mxu0 0
        %1373 = vmatprep.mubr.bf16.mxu0 0
        %1374 = vmatmul.mubr.bf16.gmra.mrb[0].mxu0 %v1292
        %v1375 = vpop.f32.mrb[0].mxu0
        %v1376 = vadd.f32 0.0, %v1375
        %v1377 = vpop.f32.mrb[0].mxu0
        %v1378 = vpop.f32.mrb[0].mxu0
        %v1379 = vpop.f32.mrb[0].mxu0
        %1380 = vdwg.mxu0
        %v1381 = vsel %vm730, %v1376, -1e+30
        %1382 = vmax.xlane.f32.xlu0 %v1381
        %v1383 = vpop.xlane.xlu0 %1382
        %v1384 = vsub.f32 %v1381, %v1383
        %v1385 = vmul.f32 %v1384, 1.442695
        %v1386 = vpow.pop %v1385
        %1387 = vadd.xlane.f32.xlu0 %v1386
        %v1388 = vpop.xlane.xlu0 %1387
        %v1389 = vrcp.pop %v1388
        %v1390 = vmul.f32 %v1386, %v1389
        %v1391 = vpack.c.bf16 %v1390, %v1390
        %v1408 = vunpack.c.l.b16 %v586
        %v1409 = vunpack.c.l.b16 %v587
        %v1410 = vunpack.c.l.b16 %v588
        %v1411 = vunpack.c.l.b16 %v589
        %v1412 = vunpack.c.l.b16 %v590
        %v1413 = vunpack.c.l.b16 %v591
        %v1414 = vunpack.c.l.b16 %v592
        %v1415 = vunpack.c.l.b16 %v593
        %v1416 = vunpack.c.l.b16 %v594
        %v1417 = vunpack.c.l.b16 %v595
        %v1418 = vunpack.c.l.b16 %v596
        %v1419 = vunpack.c.l.b16 %v597
        %v1420 = vunpack.c.l.b16 %v598
        %v1421 = vunpack.c.l.b16 %v599
        %v1422 = vunpack.c.l.b16 %v600
        %v1423 = vunpack.c.l.b16 %v601
        %v1424 = vpack.c.b16 %v1409, %v1408
        %v1425 = vpack.c.b16 %v1411, %v1410
        %v1426 = vpack.c.b16 %v1413, %v1412
        %v1427 = vpack.c.b16 %v1415, %v1414
        %v1428 = vpack.c.b16 %v1417, %v1416
        %v1429 = vpack.c.b16 %v1419, %v1418
        %v1430 = vpack.c.b16 %v1421, %v1420
        %v1431 = vpack.c.b16 %v1423, %v1422
        %1440 = vmatprep.subr.bf16.mxu0 0
        %1441 = vmatpush1.bf16.msra.mxu0 %v1424
        %1442 = vmatprep.subr.bf16.mxu0 0
        %1443 = vmatpush1.bf16.msra.mxu0 %v1425
        %1444 = vmatprep.subr.bf16.mxu0 0
        %1445 = vmatpush1.bf16.msra.mxu0 %v1426
        %1446 = vmatprep.subr.bf16.mxu0 0
        %1447 = vmatpush1.bf16.msra.mxu0 %v1427
        %1448 = vmatprep.subr.bf16.mxu0 0
        %1449 = vmatpush1.bf16.msra.mxu0 %v1428
        %1450 = vmatprep.subr.bf16.mxu0 0
        %1451 = vmatpush1.bf16.msra.mxu0 %v1429
        %1452 = vmatprep.subr.bf16.mxu0 0
        %1453 = vmatpush1.bf16.msra.mxu0 %v1430
        %1454 = vmatprep.subr.bf16.mxu0 0
        %1455 = vmatpush1.bf16.msra.mxu0 %v1431
        %1456 = vmatprep.subr.bf16.mxu0 0
        %1457 = vmatpush1.bf16.msra.mxu0 0
        %1458 = vmatprep.subr.bf16.mxu0 0
        %1459 = vmatpush1.bf16.msra.mxu0 0
        %1460 = vmatprep.subr.bf16.mxu0 0
        %1461 = vmatpush1.bf16.msra.mxu0 0
        %1462 = vmatprep.subr.bf16.mxu0 0
        %1463 = vmatpush1.bf16.msra.mxu0 0
        %1464 = vmatprep.subr.bf16.mxu0 0
        %1465 = vmatpush1.bf16.msra.mxu0 0
        %1466 = vmatprep.subr.bf16.mxu0 0
        %1467 = vmatpush1.bf16.msra.mxu0 0
        %1468 = vmatprep.subr.bf16.mxu0 0
        %1469 = vmatpush1.bf16.msra.mxu0 0
        %1470 = vmatprep.subr.bf16.mxu0 0
        %1471 = vmatpush1.bf16.msra.mxu0 0
        %1472 = vmatprep.mubr.bf16.mxu0 0
        %1473 = vmatmul.mubr.bf16.gmra.mrb[0].mxu0 %v1391
        %v1474 = vpop.f32.mrb[0].mxu0
        %v1475 = vadd.f32 0.0, %v1474
        %v1476 = vpop.f32.mrb[0].mxu0
        %v1477 = vpop.f32.mrb[0].mxu0
        %v1478 = vpop.f32.mrb[0].mxu0
        %1479 = vdwg.mxu0
        %v1480 = vpack.c.bf16 %v1475, %v1475
        %v1481 = vld [vmem:[%s9] sm:$0xf]
        %v1482 = vld [vmem:[%s9 + $0x4] sm:$0xf]
        %v1483 = vld [vmem:[%s9 + $0x8] sm:$0xf]
        %v1484 = vld [vmem:[%s9 + $0xc] sm:$0xf]
        %v1485 = vld [vmem:[%s9 + $0x10] sm:$0xf]
        %v1486 = vld [vmem:[%s9 + $0x14] sm:$0xf]
        %v1487 = vld [vmem:[%s9 + $0x18] sm:$0xf]
        %v1488 = vld [vmem:[%s9 + $0x1c] sm:$0xf]
        %v1489 = vld [vmem:[%s9 + $0x20] sm:$0xf]
        %v1490 = vld [vmem:[%s9 + $0x24] sm:$0xf]
        %v1491 = vld [vmem:[%s9 + $0x28] sm:$0xf]
        %v1492 = vld [vmem:[%s9 + $0x2c] sm:$0xf]
        %v1493 = vld [vmem:[%s9 + $0x30] sm:$0xf]
        %v1494 = vld [vmem:[%s9 + $0x34] sm:$0xf]
        %v1495 = vld [vmem:[%s9 + $0x38] sm:$0xf]
        %v1496 = vld [vmem:[%s9 + $0x3c] sm:$0xf]
        %v1497 = vld [vmem:[%s10] sm:$0x1]
        %v1499 = vlaneseq
        %v1500 = vshrl.u32 %v1499, 7
        %v1501 = vsub.s32 0, %v1500
        %v1502 = vrot.slane %v1497, %v1501
        %v1520 = vunpack.c.l.b16 %v1481
        %v1521 = vunpack.c.l.b16 %v1482
        %v1522 = vunpack.c.l.b16 %v1483
        %v1523 = vunpack.c.l.b16 %v1484
        %v1524 = vunpack.c.l.b16 %v1485
        %v1525 = vunpack.c.l.b16 %v1486
        %v1526 = vunpack.c.l.b16 %v1487
        %v1527 = vunpack.c.l.b16 %v1488
        %v1528 = vunpack.c.l.b16 %v1489
        %v1529 = vunpack.c.l.b16 %v1490
        %v1530 = vunpack.c.l.b16 %v1491
        %v1531 = vunpack.c.l.b16 %v1492
        %v1532 = vunpack.c.l.b16 %v1493
        %v1533 = vunpack.c.l.b16 %v1494
        %v1534 = vunpack.c.l.b16 %v1495
        %v1535 = vunpack.c.l.b16 %v1496
        %v1536 = vpack.c.b16 %v1521, %v1520
        %v1537 = vpack.c.b16 %v1523, %v1522
        %v1538 = vpack.c.b16 %v1525, %v1524
        %v1539 = vpack.c.b16 %v1527, %v1526
        %v1540 = vpack.c.b16 %v1529, %v1528
        %v1541 = vpack.c.b16 %v1531, %v1530
        %v1542 = vpack.c.b16 %v1533, %v1532
        %v1543 = vpack.c.b16 %v1535, %v1534
        %1552 = vmatprep.subr.bf16.mxu0 0
        %1553 = vmatpush1.bf16.msra.mxu0 %v1536
        %1554 = vmatprep.subr.bf16.mxu0 0
        %1555 = vmatpush1.bf16.msra.mxu0 %v1537
        %1556 = vmatprep.subr.bf16.mxu0 0
        %1557 = vmatpush1.bf16.msra.mxu0 %v1538
        %1558 = vmatprep.subr.bf16.mxu0 0
        %1559 = vmatpush1.bf16.msra.mxu0 %v1539
        %1560 = vmatprep.subr.bf16.mxu0 0
        %1561 = vmatpush1.bf16.msra.mxu0 %v1540
        %1562 = vmatprep.subr.bf16.mxu0 0
        %1563 = vmatpush1.bf16.msra.mxu0 %v1541
        %1564 = vmatprep.subr.bf16.mxu0 0
        %1565 = vmatpush1.bf16.msra.mxu0 %v1542
        %1566 = vmatprep.subr.bf16.mxu0 0
        %1567 = vmatpush1.bf16.msra.mxu0 %v1543
        %1568 = vmatprep.subr.bf16.mxu0 0
        %1569 = vmatpush1.bf16.msra.mxu0 0
        %1570 = vmatprep.subr.bf16.mxu0 0
        %1571 = vmatpush1.bf16.msra.mxu0 0
        %1572 = vmatprep.subr.bf16.mxu0 0
        %1573 = vmatpush1.bf16.msra.mxu0 0
        %1574 = vmatprep.subr.bf16.mxu0 0
        %1575 = vmatpush1.bf16.msra.mxu0 0
        %1576 = vmatprep.subr.bf16.mxu0 0
        %1577 = vmatpush1.bf16.msra.mxu0 0
        %1578 = vmatprep.subr.bf16.mxu0 0
        %1579 = vmatpush1.bf16.msra.mxu0 0
        %1580 = vmatprep.subr.bf16.mxu0 0
        %1581 = vmatpush1.bf16.msra.mxu0 0
        %1582 = vmatprep.subr.bf16.mxu0 0
        %1583 = vmatpush1.bf16.msra.mxu0 0
        %1584 = vmatprep.mubr.bf16.mxu0 0
        %1585 = vmatmul.mubr.bf16.gmra.mrb[0].mxu0 %v1480
        %v1586 = vpop.f32.mrb[0].mxu0
        %v1587 = vadd.f32 %v1502, %v1586
        %v1588 = vpop.f32.mrb[0].mxu0
        %v1589 = vpop.f32.mrb[0].mxu0
        %v1590 = vpop.f32.mrb[0].mxu0
        %1591 = vdwg.mxu0
        %v1592 = vadd.f32 %v1177, %v1587
        %v1593 = vmul.f32 %v1592, 0.70710677
        %v1594 = vadd.f32 %v1593, %v709
        %v1595 = vmul.f32 %v1594, 0.70710677
        %s1596 = scalar_lea.vmem %s6, 2
        %v1597 = vld [vmem:[%s1596] sm:$0x3]
        %v1598 = vrot.slane %v1595, 6
        %v1599 = vsel %vm732, %v1598, 0.0
        %v1600 = vpack.c.bf16 %v1599, %v1599
        %s1601 = scalar_lea.vmem %s5, 384
        %v1602 = vld [vmem:[%s1601] sm:$0xff]
        %v1603 = vld [vmem:[%s1601 + $0x8] sm:$0xff]
        %v1604 = vld [vmem:[%s1601 + $0x10] sm:$0xff]
        %v1605 = vld [vmem:[%s1601 + $0x18] sm:$0xff]
        %v1606 = vld [vmem:[%s1601 + $0x20] sm:$0xff]
        %v1607 = vld [vmem:[%s1601 + $0x28] sm:$0xff]
        %v1608 = vld [vmem:[%s1601 + $0x30] sm:$0xff]
        %v1609 = vld [vmem:[%s1601 + $0x38] sm:$0xff]
        %v1610 = vld [vmem:[%s1601 + $0x40] sm:$0xff]
        %v1611 = vld [vmem:[%s1601 + $0x48] sm:$0xff]
        %v1612 = vld [vmem:[%s1601 + $0x50] sm:$0xff]
        %v1613 = vld [vmem:[%s1601 + $0x58] sm:$0xff]
        %v1614 = vld [vmem:[%s1601 + $0x60] sm:$0xff]
        %v1615 = vld [vmem:[%s1601 + $0x68] sm:$0xff]
        %v1616 = vld [vmem:[%s1601 + $0x70] sm:$0xff]
        %v1617 = vld [vmem:[%s1601 + $0x78] sm:$0xff]
        %v1634 = vunpack.c.l.b16 %v1602
        %v1635 = vunpack.c.h.b16 %v1602
        %v1636 = vunpack.c.l.b16 %v1603
        %v1637 = vunpack.c.h.b16 %v1603
        %v1638 = vunpack.c.l.b16 %v1604
        %v1639 = vunpack.c.h.b16 %v1604
        %v1640 = vunpack.c.l.b16 %v1605
        %v1641 = vunpack.c.h.b16 %v1605
        %v1642 = vunpack.c.l.b16 %v1606
        %v1643 = vunpack.c.h.b16 %v1606
        %v1644 = vunpack.c.l.b16 %v1607
        %v1645 = vunpack.c.h.b16 %v1607
        %v1646 = vunpack.c.l.b16 %v1608
        %v1647 = vunpack.c.h.b16 %v1608
        %v1648 = vunpack.c.l.b16 %v1609
        %v1649 = vunpack.c.h.b16 %v1609
        %v1650 = vunpack.c.l.b16 %v1610
        %v1651 = vunpack.c.h.b16 %v1610
        %v1652 = vunpack.c.l.b16 %v1611
        %v1653 = vunpack.c.h.b16 %v1611
        %v1654 = vunpack.c.l.b16 %v1612
        %v1655 = vunpack.c.h.b16 %v1612
        %v1656 = vunpack.c.l.b16 %v1613
        %v1657 = vunpack.c.h.b16 %v1613
        %v1658 = vunpack.c.l.b16 %v1614
        %v1659 = vunpack.c.h.b16 %v1614
        %v1660 = vunpack.c.l.b16 %v1615
        %v1661 = vunpack.c.h.b16 %v1615
        %v1662 = vunpack.c.l.b16 %v1616
        %v1663 = vunpack.c.h.b16 %v1616
        %v1664 = vunpack.c.l.b16 %v1617
        %v1665 = vunpack.c.h.b16 %v1617
        %v1666 = vpack.c.b16 %v1636, %v1634
        %v1667 = vpack.c.b16 %v1637, %v1635
        %v1668 = vpack.c.b16 %v1640, %v1638
        %v1669 = vpack.c.b16 %v1641, %v1639
        %v1670 = vpack.c.b16 %v1644, %v1642
        %v1671 = vpack.c.b16 %v1645, %v1643
        %v1672 = vpack.c.b16 %v1648, %v1646
        %v1673 = vpack.c.b16 %v1649, %v1647
        %v1674 = vpack.c.b16 %v1652, %v1650
        %v1675 = vpack.c.b16 %v1653, %v1651
        %v1676 = vpack.c.b16 %v1656, %v1654
        %v1677 = vpack.c.b16 %v1657, %v1655
        %v1678 = vpack.c.b16 %v1660, %v1658
        %v1679 = vpack.c.b16 %v1661, %v1659
        %v1680 = vpack.c.b16 %v1664, %v1662
        %v1681 = vpack.c.b16 %v1665, %v1663
        %1698 = vmatprep.subr.bf16.mxu0 %v1667
        %1699 = vmatpush1.bf16.msra.mxu0 %v1666
        %1700 = vmatprep.subr.bf16.mxu0 %v1669
        %1701 = vmatpush1.bf16.msra.mxu0 %v1668
        %1702 = vmatprep.subr.bf16.mxu0 %v1671
        %1703 = vmatpush1.bf16.msra.mxu0 %v1670
        %1704 = vmatprep.subr.bf16.mxu0 %v1673
        %1705 = vmatpush1.bf16.msra.mxu0 %v1672
        %1706 = vmatprep.subr.bf16.mxu0 %v1675
        %1707 = vmatpush1.bf16.msra.mxu0 %v1674
        %1708 = vmatprep.subr.bf16.mxu0 %v1677
        %1709 = vmatpush1.bf16.msra.mxu0 %v1676
        %1710 = vmatprep.subr.bf16.mxu0 %v1679
        %1711 = vmatpush1.bf16.msra.mxu0 %v1678
        %1712 = vmatprep.subr.bf16.mxu0 %v1681
        %1713 = vmatpush1.bf16.msra.mxu0 %v1680
        %1714 = vmatprep.subr.bf16.mxu0 0
        %1715 = vmatpush1.bf16.msra.mxu0 0
        %1716 = vmatprep.subr.bf16.mxu0 0
        %1717 = vmatpush1.bf16.msra.mxu0 0
        %1718 = vmatprep.subr.bf16.mxu0 0
        %1719 = vmatpush1.bf16.msra.mxu0 0
        %1720 = vmatprep.subr.bf16.mxu0 0
        %1721 = vmatpush1.bf16.msra.mxu0 0
        %1722 = vmatprep.subr.bf16.mxu0 0
        %1723 = vmatpush1.bf16.msra.mxu0 0
        %1724 = vmatprep.subr.bf16.mxu0 0
        %1725 = vmatpush1.bf16.msra.mxu0 0
        %1726 = vmatprep.subr.bf16.mxu0 0
        %1727 = vmatpush1.bf16.msra.mxu0 0
        %1728 = vmatprep.subr.bf16.mxu0 0
        %1729 = vmatpush1.bf16.msra.mxu0 0
        %1730 = vmatprep.mubr.bf16.mxu0 0
        %1731 = vmatmul.mubr.bf16.gmra.mrb[0].mxu0 %v1600
        %v1732 = vpop.f32.mrb[0].mxu0
        %v1733 = vadd.f32 0.0, %v1732
        %v1734 = vpop.f32.mrb[0].mxu0
        %v1735 = vadd.f32 0.0, %v1734
        %v1736 = vpop.f32.mrb[0].mxu0
        %v1737 = vpop.f32.mrb[0].mxu0
        %1738 = vdwg.mxu0
        %v1740 = vlaneseq
        %v1741 = vshrl.u32 %v1740, 7
        %v1742 = vsub.s32 0, %v1741
        %v1743 = vrot.slane %v1597, %v1742
        %v1744 = vlaneseq
        %v1745 = vshrl.u32 %v1744, 7
        %v1746 = vsub.s32 1, %v1745
        %v1747 = vrot.slane %v1597, %v1746
        %v1750 = vadd.f32 %v1743, %v1733
        %v1751 = vadd.f32 %v1747, %v1735
        %v1752 = vrot.slane %v1595, 7
        %v1753 = vsel %vm886, %v1752, 0.0
        %v1754 = vpack.c.bf16 %v1753, %v1753
        %s1755 = scalar_lea.vmem %s5, 512
        %v1756 = vld [vmem:[%s1755] sm:$0xff]
        %v1757 = vld [vmem:[%s1755 + $0x8] sm:$0xff]
        %v1758 = vld [vmem:[%s1755 + $0x10] sm:$0xff]
        %v1759 = vld [vmem:[%s1755 + $0x18] sm:$0xff]
        %v1760 = vld [vmem:[%s1755 + $0x20] sm:$0xff]
        %v1761 = vld [vmem:[%s1755 + $0x28] sm:$0xff]
        %v1762 = vld [vmem:[%s1755 + $0x30] sm:$0xff]
        %v1763 = vld [vmem:[%s1755 + $0x38] sm:$0xff]
        %v1764 = vld [vmem:[%s1755 + $0x40] sm:$0xff]
        %v1765 = vld [vmem:[%s1755 + $0x48] sm:$0xff]
        %v1766 = vld [vmem:[%s1755 + $0x50] sm:$0xff]
        %v1767 = vld [vmem:[%s1755 + $0x58] sm:$0xff]
        %v1768 = vld [vmem:[%s1755 + $0x60] sm:$0xff]
        %v1769 = vld [vmem:[%s1755 + $0x68] sm:$0xff]
        %v1770 = vld [vmem:[%s1755 + $0x70] sm:$0xff]
        %v1771 = vld [vmem:[%s1755 + $0x78] sm:$0xff]
        %v1788 = vunpack.c.l.b16 %v1756
        %v1789 = vunpack.c.h.b16 %v1756
        %v1790 = vunpack.c.l.b16 %v1757
        %v1791 = vunpack.c.h.b16 %v1757
        %v1792 = vunpack.c.l.b16 %v1758
        %v1793 = vunpack.c.h.b16 %v1758
        %v1794 = vunpack.c.l.b16 %v1759
        %v1795 = vunpack.c.h.b16 %v1759
        %v1796 = vunpack.c.l.b16 %v1760
        %v1797 = vunpack.c.h.b16 %v1760
        %v1798 = vunpack.c.l.b16 %v1761
        %v1799 = vunpack.c.h.b16 %v1761
        %v1800 = vunpack.c.l.b16 %v1762
        %v1801 = vunpack.c.h.b16 %v1762
        %v1802 = vunpack.c.l.b16 %v1763
        %v1803 = vunpack.c.h.b16 %v1763
        %v1804 = vunpack.c.l.b16 %v1764
        %v1805 = vunpack.c.h.b16 %v1764
        %v1806 = vunpack.c.l.b16 %v1765
        %v1807 = vunpack.c.h.b16 %v1765
        %v1808 = vunpack.c.l.b16 %v1766
        %v1809 = vunpack.c.h.b16 %v1766
        %v1810 = vunpack.c.l.b16 %v1767
        %v1811 = vunpack.c.h.b16 %v1767
        %v1812 = vunpack.c.l.b16 %v1768
        %v1813 = vunpack.c.h.b16 %v1768
        %v1814 = vunpack.c.l.b16 %v1769
        %v1815 = vunpack.c.h.b16 %v1769
        %v1816 = vunpack.c.l.b16 %v1770
        %v1817 = vunpack.c.h.b16 %v1770
        %v1818 = vunpack.c.l.b16 %v1771
        %v1819 = vunpack.c.h.b16 %v1771
        %v1820 = vpack.c.b16 %v1790, %v1788
        %v1821 = vpack.c.b16 %v1791, %v1789
        %v1822 = vpack.c.b16 %v1794, %v1792
        %v1823 = vpack.c.b16 %v1795, %v1793
        %v1824 = vpack.c.b16 %v1798, %v1796
        %v1825 = vpack.c.b16 %v1799, %v1797
        %v1826 = vpack.c.b16 %v1802, %v1800
        %v1827 = vpack.c.b16 %v1803, %v1801
        %v1828 = vpack.c.b16 %v1806, %v1804
        %v1829 = vpack.c.b16 %v1807, %v1805
        %v1830 = vpack.c.b16 %v1810, %v1808
        %v1831 = vpack.c.b16 %v1811, %v1809
        %v1832 = vpack.c.b16 %v1814, %v1812
        %v1833 = vpack.c.b16 %v1815, %v1813
        %v1834 = vpack.c.b16 %v1818, %v1816
        %v1835 = vpack.c.b16 %v1819, %v1817
        %1852 = vmatprep.subr.bf16.mxu0 %v1821
        %1853 = vmatpush1.bf16.msra.mxu0 %v1820
        %1854 = vmatprep.subr.bf16.mxu0 %v1823
        %1855 = vmatpush1.bf16.msra.mxu0 %v1822
        %1856 = vmatprep.subr.bf16.mxu0 %v1825
        %1857 = vmatpush1.bf16.msra.mxu0 %v1824
        %1858 = vmatprep.subr.bf16.mxu0 %v1827
        %1859 = vmatpush1.bf16.msra.mxu0 %v1826
        %1860 = vmatprep.subr.bf16.mxu0 %v1829
        %1861 = vmatpush1.bf16.msra.mxu0 %v1828
        %1862 = vmatprep.subr.bf16.mxu0 %v1831
        %1863 = vmatpush1.bf16.msra.mxu0 %v1830
        %1864 = vmatprep.subr.bf16.mxu0 %v1833
        %1865 = vmatpush1.bf16.msra.mxu0 %v1832
        %1866 = vmatprep.subr.bf16.mxu0 %v1835
        %1867 = vmatpush1.bf16.msra.mxu0 %v1834
        %1868 = vmatprep.subr.bf16.mxu0 0
        %1869 = vmatpush1.bf16.msra.mxu0 0
        %1870 = vmatprep.subr.bf16.mxu0 0
        %1871 = vmatpush1.bf16.msra.mxu0 0
        %1872 = vmatprep.subr.bf16.mxu0 0
        %1873 = vmatpush1.bf16.msra.mxu0 0
        %1874 = vmatprep.subr.bf16.mxu0 0
        %1875 = vmatpush1.bf16.msra.mxu0 0
        %1876 = vmatprep.subr.bf16.mxu0 0
        %1877 = vmatpush1.bf16.msra.mxu0 0
        %1878 = vmatprep.subr.bf16.mxu0 0
        %1879 = vmatpush1.bf16.msra.mxu0 0
        %1880 = vmatprep.subr.bf16.mxu0 0
        %1881 = vmatpush1.bf16.msra.mxu0 0
        %1882 = vmatprep.subr.bf16.mxu0 0
        %1883 = vmatpush1.bf16.msra.mxu0 0
        %1884 = vmatprep.mubr.bf16.mxu0 0
        %1885 = vmatmul.mubr.bf16.gmra.mrb[0].mxu0 %v1754
        %v1886 = vpop.f32.mrb[0].mxu0
        %v1887 = vadd.f32 0.0, %v1886
        %v1888 = vpop.f32.mrb[0].mxu0
        %v1889 = vadd.f32 0.0, %v1888
        %v1890 = vpop.f32.mrb[0].mxu0
        %v1891 = vpop.f32.mrb[0].mxu0
        %1892 = vdwg.mxu0
        %v1893 = vadd.f32 %v1750, %v1887
        %v1894 = vadd.f32 %v1751, %v1889
        %v1895 = vpack.c.bf16 %v1595, %v1595
        %s1896 = scalar_lea.vmem %s5, 640
        %v1897 = vld [vmem:[%s1896] sm:$0xff]
        %v1898 = vld [vmem:[%s1896 + $0x8] sm:$0xff]
        %v1899 = vld [vmem:[%s1896 + $0x10] sm:$0xff]
        %v1900 = vld [vmem:[%s1896 + $0x18] sm:$0xff]
        %v1901 = vld [vmem:[%s1896 + $0x20] sm:$0xff]
        %v1902 = vld [vmem:[%s1896 + $0x28] sm:$0xff]
        %v1903 = vld [vmem:[%s1896 + $0x30] sm:$0xff]
        %v1904 = vld [vmem:[%s1896 + $0x38] sm:$0xff]
        %v1905 = vld [vmem:[%s1896 + $0x40] sm:$0xff]
        %v1906 = vld [vmem:[%s1896 + $0x48] sm:$0xff]
        %v1907 = vld [vmem:[%s1896 + $0x50] sm:$0xff]
        %v1908 = vld [vmem:[%s1896 + $0x58] sm:$0xff]
        %v1909 = vld [vmem:[%s1896 + $0x60] sm:$0xff]
        %v1910 = vld [vmem:[%s1896 + $0x68] sm:$0xff]
        %v1911 = vld [vmem:[%s1896 + $0x70] sm:$0xff]
        %v1912 = vld [vmem:[%s1896 + $0x78] sm:$0xff]
        %v1929 = vunpack.c.l.b16 %v1897
        %v1930 = vunpack.c.h.b16 %v1897
        %v1931 = vunpack.c.l.b16 %v1898
        %v1932 = vunpack.c.h.b16 %v1898
        %v1933 = vunpack.c.l.b16 %v1899
        %v1934 = vunpack.c.h.b16 %v1899
        %v1935 = vunpack.c.l.b16 %v1900
        %v1936 = vunpack.c.h.b16 %v1900
        %v1937 = vunpack.c.l.b16 %v1901
        %v1938 = vunpack.c.h.b16 %v1901
        %v1939 = vunpack.c.l.b16 %v1902
        %v1940 = vunpack.c.h.b16 %v1902
        %v1941 = vunpack.c.l.b16 %v1903
        %v1942 = vunpack.c.h.b16 %v1903
        %v1943 = vunpack.c.l.b16 %v1904
        %v1944 = vunpack.c.h.b16 %v1904
        %v1945 = vunpack.c.l.b16 %v1905
        %v1946 = vunpack.c.h.b16 %v1905
        %v1947 = vunpack.c.l.b16 %v1906
        %v1948 = vunpack.c.h.b16 %v1906
        %v1949 = vunpack.c.l.b16 %v1907
        %v1950 = vunpack.c.h.b16 %v1907
        %v1951 = vunpack.c.l.b16 %v1908
        %v1952 = vunpack.c.h.b16 %v1908
        %v1953 = vunpack.c.l.b16 %v1909
        %v1954 = vunpack.c.h.b16 %v1909
        %v1955 = vunpack.c.l.b16 %v1910
        %v1956 = vunpack.c.h.b16 %v1910
        %v1957 = vunpack.c.l.b16 %v1911
        %v1958 = vunpack.c.h.b16 %v1911
        %v1959 = vunpack.c.l.b16 %v1912
        %v1960 = vunpack.c.h.b16 %v1912
        %v1961 = vpack.c.b16 %v1931, %v1929
        %v1962 = vpack.c.b16 %v1932, %v1930
        %v1963 = vpack.c.b16 %v1935, %v1933
        %v1964 = vpack.c.b16 %v1936, %v1934
        %v1965 = vpack.c.b16 %v1939, %v1937
        %v1966 = vpack.c.b16 %v1940, %v1938
        %v1967 = vpack.c.b16 %v1943, %v1941
        %v1968 = vpack.c.b16 %v1944, %v1942
        %v1969 = vpack.c.b16 %v1947, %v1945
        %v1970 = vpack.c.b16 %v1948, %v1946
        %v1971 = vpack.c.b16 %v1951, %v1949
        %v1972 = vpack.c.b16 %v1952, %v1950
        %v1973 = vpack.c.b16 %v1955, %v1953
        %v1974 = vpack.c.b16 %v1956, %v1954
        %v1975 = vpack.c.b16 %v1959, %v1957
        %v1976 = vpack.c.b16 %v1960, %v1958
        %1993 = vmatprep.subr.bf16.mxu0 %v1962
        %1994 = vmatpush1.bf16.msra.mxu0 %v1961
        %1995 = vmatprep.subr.bf16.mxu0 %v1964
        %1996 = vmatpush1.bf16.msra.mxu0 %v1963
        %1997 = vmatprep.subr.bf16.mxu0 %v1966
        %1998 = vmatpush1.bf16.msra.mxu0 %v1965
        %1999 = vmatprep.subr.bf16.mxu0 %v1968
        %2000 = vmatpush1.bf16.msra.mxu0 %v1967
        %2001 = vmatprep.subr.bf16.mxu0 %v1970
        %2002 = vmatpush1.bf16.msra.mxu0 %v1969
        %2003 = vmatprep.subr.bf16.mxu0 %v1972
        %2004 = vmatpush1.bf16.msra.mxu0 %v1971
        %2005 = vmatprep.subr.bf16.mxu0 %v1974
        %2006 = vmatpush1.bf16.msra.mxu0 %v1973
        %2007 = vmatprep.subr.bf16.mxu0 %v1976
        %2008 = vmatpush1.bf16.msra.mxu0 %v1975
        %2009 = vmatprep.subr.bf16.mxu0 0
        %2010 = vmatpush1.bf16.msra.mxu0 0
        %2011 = vmatprep.subr.bf16.mxu0 0
        %2012 = vmatpush1.bf16.msra.mxu0 0
        %2013 = vmatprep.subr.bf16.mxu0 0
        %2014 = vmatpush1.bf16.msra.mxu0 0
        %2015 = vmatprep.subr.bf16.mxu0 0
        %2016 = vmatpush1.bf16.msra.mxu0 0
        %2017 = vmatprep.subr.bf16.mxu0 0
        %2018 = vmatpush1.bf16.msra.mxu0 0
        %2019 = vmatprep.subr.bf16.mxu0 0
        %2020 = vmatpush1.bf16.msra.mxu0 0
        %2021 = vmatprep.subr.bf16.mxu0 0
        %2022 = vmatpush1.bf16.msra.mxu0 0
        %2023 = vmatprep.subr.bf16.mxu0 0
        %2024 = vmatpush1.bf16.msra.mxu0 0
        %2025 = vmatprep.mubr.bf16.mxu0 0
        %2026 = vmatmul.mubr.bf16.gmra.mrb[0].mxu0 %v1895
        %v2027 = vpop.f32.mrb[0].mxu0
        %v2028 = vadd.f32 0.0, %v2027
        %v2029 = vpop.f32.mrb[0].mxu0
        %v2030 = vadd.f32 0.0, %v2029
        %v2031 = vpop.f32.mrb[0].mxu0
        %v2032 = vpop.f32.mrb[0].mxu0
        %2033 = vdwg.mxu0
        %v2034 = vadd.f32 %v1893, %v2028
        %v2035 = vadd.f32 %v1894, %v2030
        %v2036 = vxor.u32 %v2035, 2147483648
        %v2037 = vmul.f32 %v2036, 1.442695
        %v2038 = vpow.pop %v2037
        %v2039 = vadd.f32 %v2038, 1.0
        %v2040 = vrcp.pop %v2039
        %v2041 = vmul.f32 1.0, %v2040
        %v2042 = vmul.f32 %v2034, %v2041
        %v2043 = vpack.c.bf16 %v2042, %v2042
        %v2044 = vld [vmem:[%s7] sm:$0xf]
        %v2045 = vld [vmem:[%s7 + $0x4] sm:$0xf]
        %v2046 = vld [vmem:[%s7 + $0x8] sm:$0xf]
        %v2047 = vld [vmem:[%s7 + $0xc] sm:$0xf]
        %v2048 = vld [vmem:[%s7 + $0x10] sm:$0xf]
        %v2049 = vld [vmem:[%s7 + $0x14] sm:$0xf]
        %v2050 = vld [vmem:[%s7 + $0x18] sm:$0xf]
        %v2051 = vld [vmem:[%s7 + $0x1c] sm:$0xf]
        %v2052 = vld [vmem:[%s7 + $0x20] sm:$0xf]
        %v2053 = vld [vmem:[%s7 + $0x24] sm:$0xf]
        %v2054 = vld [vmem:[%s7 + $0x28] sm:$0xf]
        %v2055 = vld [vmem:[%s7 + $0x2c] sm:$0xf]
        %v2056 = vld [vmem:[%s7 + $0x30] sm:$0xf]
        %v2057 = vld [vmem:[%s7 + $0x34] sm:$0xf]
        %v2058 = vld [vmem:[%s7 + $0x38] sm:$0xf]
        %v2059 = vld [vmem:[%s7 + $0x3c] sm:$0xf]
        %v2060 = vld [vmem:[%s8] sm:$0x1]
        %v2062 = vlaneseq
        %v2063 = vshrl.u32 %v2062, 7
        %v2064 = vsub.s32 0, %v2063
        %v2065 = vrot.slane %v2060, %v2064
        %v2083 = vunpack.c.l.b16 %v2044
        %v2084 = vunpack.c.l.b16 %v2045
        %v2085 = vunpack.c.l.b16 %v2046
        %v2086 = vunpack.c.l.b16 %v2047
        %v2087 = vunpack.c.l.b16 %v2048
        %v2088 = vunpack.c.l.b16 %v2049
        %v2089 = vunpack.c.l.b16 %v2050
        %v2090 = vunpack.c.l.b16 %v2051
        %v2091 = vunpack.c.l.b16 %v2052
        %v2092 = vunpack.c.l.b16 %v2053
        %v2093 = vunpack.c.l.b16 %v2054
        %v2094 = vunpack.c.l.b16 %v2055
        %v2095 = vunpack.c.l.b16 %v2056
        %v2096 = vunpack.c.l.b16 %v2057
        %v2097 = vunpack.c.l.b16 %v2058
        %v2098 = vunpack.c.l.b16 %v2059
        %v2099 = vpack.c.b16 %v2084, %v2083
        %v2100 = vpack.c.b16 %v2086, %v2085
        %v2101 = vpack.c.b16 %v2088, %v2087
        %v2102 = vpack.c.b16 %v2090, %v2089
        %v2103 = vpack.c.b16 %v2092, %v2091
        %v2104 = vpack.c.b16 %v2094, %v2093
        %v2105 = vpack.c.b16 %v2096, %v2095
        %v2106 = vpack.c.b16 %v2098, %v2097
        %2115 = vmatprep.subr.bf16.mxu0 0
        %2116 = vmatpush1.bf16.msra.mxu0 %v2099
        %2117 = vmatprep.subr.bf16.mxu0 0
        %2118 = vmatpush1.bf16.msra.mxu0 %v2100
        %2119 = vmatprep.subr.bf16.mxu0 0
        %2120 = vmatpush1.bf16.msra.mxu0 %v2101
        %2121 = vmatprep.subr.bf16.mxu0 0
        %2122 = vmatpush1.bf16.msra.mxu0 %v2102
        %2123 = vmatprep.subr.bf16.mxu0 0
        %2124 = vmatpush1.bf16.msra.mxu0 %v2103
        %2125 = vmatprep.subr.bf16.mxu0 0
        %2126 = vmatpush1.bf16.msra.mxu0 %v2104
        %2127 = vmatprep.subr.bf16.mxu0 0
        %2128 = vmatpush1.bf16.msra.mxu0 %v2105
        %2129 = vmatprep.subr.bf16.mxu0 0
        %2130 = vmatpush1.bf16.msra.mxu0 %v2106
        %2131 = vmatprep.subr.bf16.mxu0 0
        %2132 = vmatpush1.bf16.msra.mxu0 0
        %2133 = vmatprep.subr.bf16.mxu0 0
        %2134 = vmatpush1.bf16.msra.mxu0 0
        %2135 = vmatprep.subr.bf16.mxu0 0
        %2136 = vmatpush1.bf16.msra.mxu0 0
        %2137 = vmatprep.subr.bf16.mxu0 0
        %2138 = vmatpush1.bf16.msra.mxu0 0
        %2139 = vmatprep.subr.bf16.mxu0 0
        %2140 = vmatpush1.bf16.msra.mxu0 0
        %2141 = vmatprep.subr.bf16.mxu0 0
        %2142 = vmatpush1.bf16.msra.mxu0 0
        %2143 = vmatprep.subr.bf16.mxu0 0
        %2144 = vmatpush1.bf16.msra.mxu0 0
        %2145 = vmatprep.subr.bf16.mxu0 0
        %2146 = vmatpush1.bf16.msra.mxu0 0
        %2147 = vmatprep.mubr.bf16.mxu0 0
        %2148 = vmatmul.mubr.bf16.gmra.mrb[0].mxu0 %v2043
        %v2149 = vpop.f32.mrb[0].mxu0
        %v2150 = vadd.f32 %v2065, %v2149
        %v2151 = vpop.f32.mrb[0].mxu0
        %v2152 = vpop.f32.mrb[0].mxu0
        %v2153 = vpop.f32.mrb[0].mxu0
        %2154 = vdwg.mxu0
        %v2155 = vadd.f32 %v2150, %v569
        %v2156 = vmul.f32 %v2155, 0.70710677
        %v2157 = vpack.c.bf16 %v2156, %v2156
        %2158 = vmatprep.subr.bf16.mxu0 0
        %2159 = vmatpush1.bf16.msra.mxu0 %v1325
        %2160 = vmatprep.subr.bf16.mxu0 0
        %2161 = vmatpush1.bf16.msra.mxu0 %v1326
        %2162 = vmatprep.subr.bf16.mxu0 0
        %2163 = vmatpush1.bf16.msra.mxu0 %v1327
        %2164 = vmatprep.subr.bf16.mxu0 0
        %2165 = vmatpush1.bf16.msra.mxu0 %v1328
        %2166 = vmatprep.subr.bf16.mxu0 0
        %2167 = vmatpush1.bf16.msra.mxu0 %v1329
        %2168 = vmatprep.subr.bf16.mxu0 0
        %2169 = vmatpush1.bf16.msra.mxu0 %v1330
        %2170 = vmatprep.subr.bf16.mxu0 0
        %2171 = vmatpush1.bf16.msra.mxu0 %v1331
        %2172 = vmatprep.subr.bf16.mxu0 0
        %2173 = vmatpush1.bf16.msra.mxu0 %v1332
        %2174 = vmatprep.subr.bf16.mxu0 0
        %2175 = vmatpush1.bf16.msra.mxu0 0
        %2176 = vmatprep.subr.bf16.mxu0 0
        %2177 = vmatpush1.bf16.msra.mxu0 0
        %2178 = vmatprep.subr.bf16.mxu0 0
        %2179 = vmatpush1.bf16.msra.mxu0 0
        %2180 = vmatprep.subr.bf16.mxu0 0
        %2181 = vmatpush1.bf16.msra.mxu0 0
        %2182 = vmatprep.subr.bf16.mxu0 0
        %2183 = vmatpush1.bf16.msra.mxu0 0
        %2184 = vmatprep.subr.bf16.mxu0 0
        %2185 = vmatpush1.bf16.msra.mxu0 0
        %2186 = vmatprep.subr.bf16.mxu0 0
        %2187 = vmatpush1.bf16.msra.mxu0 0
        %2188 = vmatprep.subr.bf16.mxu0 0
        %2189 = vmatpush1.bf16.msra.mxu0 0
        %2190 = vmatprep.mubr.bf16.mxu0 0
        %2191 = vmatmul.mubr.bf16.gmra.mrb[0].mxu0 %v2157
        %v2192 = vpop.f32.mrb[0].mxu0
        %v2193 = vadd.f32 0.0, %v2192
        %v2194 = vpop.f32.mrb[0].mxu0
        %v2195 = vpop.f32.mrb[0].mxu0
        %v2196 = vpop.f32.mrb[0].mxu0
        %2197 = vdwg.mxu0
        %v2198 = vsel %vm730, %v2193, -1e+30
        %2199 = vmax.xlane.f32.xlu0 %v2198
        %v2200 = vpop.xlane.xlu0 %2199
        %v2201 = vsub.f32 %v2198, %v2200
        %v2202 = vmul.f32 %v2201, 1.442695
        %v2203 = vpow.pop %v2202
        %2204 = vadd.xlane.f32.xlu0 %v2203
        %v2205 = vpop.xlane.xlu0 %2204
        %v2206 = vrcp.pop %v2205
        %v2207 = vmul.f32 %v2203, %v2206
        %v2208 = vpack.c.bf16 %v2207, %v2207
        %2209 = vmatprep.subr.bf16.mxu0 0
        %2210 = vmatpush1.bf16.msra.mxu0 %v1424
        %2211 = vmatprep.subr.bf16.mxu0 0
        %2212 = vmatpush1.bf16.msra.mxu0 %v1425
        %2213 = vmatprep.subr.bf16.mxu0 0
        %2214 = vmatpush1.bf16.msra.mxu0 %v1426
        %2215 = vmatprep.subr.bf16.mxu0 0
        %2216 = vmatpush1.bf16.msra.mxu0 %v1427
        %2217 = vmatprep.subr.bf16.mxu0 0
        %2218 = vmatpush1.bf16.msra.mxu0 %v1428
        %2219 = vmatprep.subr.bf16.mxu0 0
        %2220 = vmatpush1.bf16.msra.mxu0 %v1429
        %2221 = vmatprep.subr.bf16.mxu0 0
        %2222 = vmatpush1.bf16.msra.mxu0 %v1430
        %2223 = vmatprep.subr.bf16.mxu0 0
        %2224 = vmatpush1.bf16.msra.mxu0 %v1431
        %2225 = vmatprep.subr.bf16.mxu0 0
        %2226 = vmatpush1.bf16.msra.mxu0 0
        %2227 = vmatprep.subr.bf16.mxu0 0
        %2228 = vmatpush1.bf16.msra.mxu0 0
        %2229 = vmatprep.subr.bf16.mxu0 0
        %2230 = vmatpush1.bf16.msra.mxu0 0
        %2231 = vmatprep.subr.bf16.mxu0 0
        %2232 = vmatpush1.bf16.msra.mxu0 0
        %2233 = vmatprep.subr.bf16.mxu0 0
        %2234 = vmatpush1.bf16.msra.mxu0 0
        %2235 = vmatprep.subr.bf16.mxu0 0
        %2236 = vmatpush1.bf16.msra.mxu0 0
        %2237 = vmatprep.subr.bf16.mxu0 0
        %2238 = vmatpush1.bf16.msra.mxu0 0
        %2239 = vmatprep.subr.bf16.mxu0 0
        %2240 = vmatpush1.bf16.msra.mxu0 0
        %2241 = vmatprep.mubr.bf16.mxu0 0
        %2242 = vmatmul.mubr.bf16.gmra.mrb[0].mxu0 %v2208
        %v2243 = vpop.f32.mrb[0].mxu0
        %v2244 = vadd.f32 0.0, %v2243
        %v2245 = vpop.f32.mrb[0].mxu0
        %v2246 = vpop.f32.mrb[0].mxu0
        %v2247 = vpop.f32.mrb[0].mxu0
        %2248 = vdwg.mxu0
        %v2249 = vpack.c.bf16 %v2244, %v2244
        %v2250 = vld [vmem:[%s9] sm:$0xf]
        %v2251 = vld [vmem:[%s9 + $0x4] sm:$0xf]
        %v2252 = vld [vmem:[%s9 + $0x8] sm:$0xf]
        %v2253 = vld [vmem:[%s9 + $0xc] sm:$0xf]
        %v2254 = vld [vmem:[%s9 + $0x10] sm:$0xf]
        %v2255 = vld [vmem:[%s9 + $0x14] sm:$0xf]
        %v2256 = vld [vmem:[%s9 + $0x18] sm:$0xf]
        %v2257 = vld [vmem:[%s9 + $0x1c] sm:$0xf]
        %v2258 = vld [vmem:[%s9 + $0x20] sm:$0xf]
        %v2259 = vld [vmem:[%s9 + $0x24] sm:$0xf]
        %v2260 = vld [vmem:[%s9 + $0x28] sm:$0xf]
        %v2261 = vld [vmem:[%s9 + $0x2c] sm:$0xf]
        %v2262 = vld [vmem:[%s9 + $0x30] sm:$0xf]
        %v2263 = vld [vmem:[%s9 + $0x34] sm:$0xf]
        %v2264 = vld [vmem:[%s9 + $0x38] sm:$0xf]
        %v2265 = vld [vmem:[%s9 + $0x3c] sm:$0xf]
        %v2266 = vld [vmem:[%s10] sm:$0x1]
        %v2268 = vlaneseq
        %v2269 = vshrl.u32 %v2268, 7
        %v2270 = vsub.s32 0, %v2269
        %v2271 = vrot.slane %v2266, %v2270
        %v2289 = vunpack.c.l.b16 %v2250
        %v2290 = vunpack.c.l.b16 %v2251
        %v2291 = vunpack.c.l.b16 %v2252
        %v2292 = vunpack.c.l.b16 %v2253
        %v2293 = vunpack.c.l.b16 %v2254
        %v2294 = vunpack.c.l.b16 %v2255
        %v2295 = vunpack.c.l.b16 %v2256
        %v2296 = vunpack.c.l.b16 %v2257
        %v2297 = vunpack.c.l.b16 %v2258
        %v2298 = vunpack.c.l.b16 %v2259
        %v2299 = vunpack.c.l.b16 %v2260
        %v2300 = vunpack.c.l.b16 %v2261
        %v2301 = vunpack.c.l.b16 %v2262
        %v2302 = vunpack.c.l.b16 %v2263
        %v2303 = vunpack.c.l.b16 %v2264
        %v2304 = vunpack.c.l.b16 %v2265
        %v2305 = vpack.c.b16 %v2290, %v2289
        %v2306 = vpack.c.b16 %v2292, %v2291
        %v2307 = vpack.c.b16 %v2294, %v2293
        %v2308 = vpack.c.b16 %v2296, %v2295
        %v2309 = vpack.c.b16 %v2298, %v2297
        %v2310 = vpack.c.b16 %v2300, %v2299
        %v2311 = vpack.c.b16 %v2302, %v2301
        %v2312 = vpack.c.b16 %v2304, %v2303
        %2321 = vmatprep.subr.bf16.mxu0 0
        %2322 = vmatpush1.bf16.msra.mxu0 %v2305
        %2323 = vmatprep.subr.bf16.mxu0 0
        %2324 = vmatpush1.bf16.msra.mxu0 %v2306
        %2325 = vmatprep.subr.bf16.mxu0 0
        %2326 = vmatpush1.bf16.msra.mxu0 %v2307
        %2327 = vmatprep.subr.bf16.mxu0 0
        %2328 = vmatpush1.bf16.msra.mxu0 %v2308
        %2329 = vmatprep.subr.bf16.mxu0 0
        %2330 = vmatpush1.bf16.msra.mxu0 %v2309
        %2331 = vmatprep.subr.bf16.mxu0 0
        %2332 = vmatpush1.bf16.msra.mxu0 %v2310
        %2333 = vmatprep.subr.bf16.mxu0 0
        %2334 = vmatpush1.bf16.msra.mxu0 %v2311
        %2335 = vmatprep.subr.bf16.mxu0 0
        %2336 = vmatpush1.bf16.msra.mxu0 %v2312
        %2337 = vmatprep.subr.bf16.mxu0 0
        %2338 = vmatpush1.bf16.msra.mxu0 0
        %2339 = vmatprep.subr.bf16.mxu0 0
        %2340 = vmatpush1.bf16.msra.mxu0 0
        %2341 = vmatprep.subr.bf16.mxu0 0
        %2342 = vmatpush1.bf16.msra.mxu0 0
        %2343 = vmatprep.subr.bf16.mxu0 0
        %2344 = vmatpush1.bf16.msra.mxu0 0
        %2345 = vmatprep.subr.bf16.mxu0 0
        %2346 = vmatpush1.bf16.msra.mxu0 0
        %2347 = vmatprep.subr.bf16.mxu0 0
        %2348 = vmatpush1.bf16.msra.mxu0 0
        %2349 = vmatprep.subr.bf16.mxu0 0
        %2350 = vmatpush1.bf16.msra.mxu0 0
        %2351 = vmatprep.subr.bf16.mxu0 0
        %2352 = vmatpush1.bf16.msra.mxu0 0
        %2353 = vmatprep.mubr.bf16.mxu0 0
        %2354 = vmatmul.mubr.bf16.gmra.mrb[0].mxu0 %v2249
        %v2355 = vpop.f32.mrb[0].mxu0
        %v2356 = vadd.f32 %v2271, %v2355
        %v2357 = vpop.f32.mrb[0].mxu0
        %v2358 = vpop.f32.mrb[0].mxu0
        %v2359 = vpop.f32.mrb[0].mxu0
        %2360 = vdwg.mxu0
        %v2361 = vadd.f32 %v2042, %v2356
        %v2362 = vmul.f32 %v2361, 0.70710677
        %v2363 = vadd.f32 %v2362, %v1595
        %v2364 = vmul.f32 %v2363, 0.70710677
        %v2365 = vpack.c.bf16 %v2364, %v2364
        %v2366 = vld [vmem:[%s11] sm:$0xf]
        %v2367 = vld [vmem:[%s11 + $0x4] sm:$0xf]
        %v2368 = vld [vmem:[%s11 + $0x8] sm:$0xf]
        %v2369 = vld [vmem:[%s11 + $0xc] sm:$0xf]
        %v2370 = vld [vmem:[%s11 + $0x10] sm:$0xf]
        %v2371 = vld [vmem:[%s11 + $0x14] sm:$0xf]
        %v2372 = vld [vmem:[%s11 + $0x18] sm:$0xf]
        %v2373 = vld [vmem:[%s11 + $0x1c] sm:$0xf]
        %v2374 = vld [vmem:[%s11 + $0x20] sm:$0xf]
        %v2375 = vld [vmem:[%s11 + $0x24] sm:$0xf]
        %v2376 = vld [vmem:[%s11 + $0x28] sm:$0xf]
        %v2377 = vld [vmem:[%s11 + $0x2c] sm:$0xf]
        %v2378 = vld [vmem:[%s11 + $0x30] sm:$0xf]
        %v2379 = vld [vmem:[%s11 + $0x34] sm:$0xf]
        %v2380 = vld [vmem:[%s11 + $0x38] sm:$0xf]
        %v2381 = vld [vmem:[%s11 + $0x3c] sm:$0xf]
        %v2382 = vld [vmem:[%s12] sm:$0x1]
        %v2384 = vlaneseq
        %v2385 = vshrl.u32 %v2384, 7
        %v2386 = vsub.s32 0, %v2385
        %v2387 = vrot.slane %v2382, %v2386
        %v2405 = vunpack.c.l.b16 %v2366
        %v2406 = vunpack.c.l.b16 %v2367
        %v2407 = vunpack.c.l.b16 %v2368
        %v2408 = vunpack.c.l.b16 %v2369
        %v2409 = vunpack.c.l.b16 %v2370
        %v2410 = vunpack.c.l.b16 %v2371
        %v2411 = vunpack.c.l.b16 %v2372
        %v2412 = vunpack.c.l.b16 %v2373
        %v2413 = vunpack.c.l.b16 %v2374
        %v2414 = vunpack.c.l.b16 %v2375
        %v2415 = vunpack.c.l.b16 %v2376
        %v2416 = vunpack.c.l.b16 %v2377
        %v2417 = vunpack.c.l.b16 %v2378
        %v2418 = vunpack.c.l.b16 %v2379
        %v2419 = vunpack.c.l.b16 %v2380
        %v2420 = vunpack.c.l.b16 %v2381
        %v2421 = vpack.c.b16 %v2406, %v2405
        %v2422 = vpack.c.b16 %v2408, %v2407
        %v2423 = vpack.c.b16 %v2410, %v2409
        %v2424 = vpack.c.b16 %v2412, %v2411
        %v2425 = vpack.c.b16 %v2414, %v2413
        %v2426 = vpack.c.b16 %v2416, %v2415
        %v2427 = vpack.c.b16 %v2418, %v2417
        %v2428 = vpack.c.b16 %v2420, %v2419
        %2437 = vmatprep.subr.bf16.mxu0 0
        %2438 = vmatpush1.bf16.msra.mxu0 %v2421
        %2439 = vmatprep.subr.bf16.mxu0 0
        %2440 = vmatpush1.bf16.msra.mxu0 %v2422
        %2441 = vmatprep.subr.bf16.mxu0 0
        %2442 = vmatpush1.bf16.msra.mxu0 %v2423
        %2443 = vmatprep.subr.bf16.mxu0 0
        %2444 = vmatpush1.bf16.msra.mxu0 %v2424
        %2445 = vmatprep.subr.bf16.mxu0 0
        %2446 = vmatpush1.bf16.msra.mxu0 %v2425
        %2447 = vmatprep.subr.bf16.mxu0 0
        %2448 = vmatpush1.bf16.msra.mxu0 %v2426
        %2449 = vmatprep.subr.bf16.mxu0 0
        %2450 = vmatpush1.bf16.msra.mxu0 %v2427
        %2451 = vmatprep.subr.bf16.mxu0 0
        %2452 = vmatpush1.bf16.msra.mxu0 %v2428
        %2453 = vmatprep.subr.bf16.mxu0 0
        %2454 = vmatpush1.bf16.msra.mxu0 0
        %2455 = vmatprep.subr.bf16.mxu0 0
        %2456 = vmatpush1.bf16.msra.mxu0 0
        %2457 = vmatprep.subr.bf16.mxu0 0
        %2458 = vmatpush1.bf16.msra.mxu0 0
        %2459 = vmatprep.subr.bf16.mxu0 0
        %2460 = vmatpush1.bf16.msra.mxu0 0
        %2461 = vmatprep.subr.bf16.mxu0 0
        %2462 = vmatpush1.bf16.msra.mxu0 0
        %2463 = vmatprep.subr.bf16.mxu0 0
        %2464 = vmatpush1.bf16.msra.mxu0 0
        %2465 = vmatprep.subr.bf16.mxu0 0
        %2466 = vmatpush1.bf16.msra.mxu0 0
        %2467 = vmatprep.subr.bf16.mxu0 0
        %2468 = vmatpush1.bf16.msra.mxu0 0
        %2469 = vmatprep.mubr.bf16.mxu0 0
        %2470 = vmatmul.mubr.bf16.gmra.mrb[0].mxu0 %v2365
        %v2471 = vpop.f32.mrb[0].mxu0
        %v2472 = vadd.f32 %v2387, %v2471
        %v2473 = vpop.f32.mrb[0].mxu0
        %v2474 = vpop.f32.mrb[0].mxu0
        %v2475 = vpop.f32.mrb[0].mxu0
        %2476 = vdwg.mxu0
        %v2477 = vpack.c.bf16 %v2472, %v2472
        %v2478 = vld [vmem:[%s13] sm:$0xf]
        %v2479 = vld [vmem:[%s13 + $0x4] sm:$0xf]
        %v2480 = vld [vmem:[%s13 + $0x8] sm:$0xf]
        %v2481 = vld [vmem:[%s13 + $0xc] sm:$0xf]
        %v2482 = vld [vmem:[%s13 + $0x10] sm:$0xf]
        %v2483 = vld [vmem:[%s13 + $0x14] sm:$0xf]
        %v2484 = vld [vmem:[%s13 + $0x18] sm:$0xf]
        %v2485 = vld [vmem:[%s13 + $0x1c] sm:$0xf]
        %v2486 = vld [vmem:[%s13 + $0x20] sm:$0xf]
        %v2487 = vld [vmem:[%s13 + $0x24] sm:$0xf]
        %v2488 = vld [vmem:[%s13 + $0x28] sm:$0xf]
        %v2489 = vld [vmem:[%s13 + $0x2c] sm:$0xf]
        %v2490 = vld [vmem:[%s13 + $0x30] sm:$0xf]
        %v2491 = vld [vmem:[%s13 + $0x34] sm:$0xf]
        %v2492 = vld [vmem:[%s13 + $0x38] sm:$0xf]
        %v2493 = vld [vmem:[%s13 + $0x3c] sm:$0xf]
        %v2494 = vld [vmem:[%s14] sm:$0x1]
        %v2496 = vlaneseq
        %v2497 = vshrl.u32 %v2496, 7
        %v2498 = vsub.s32 0, %v2497
        %v2499 = vrot.slane %v2494, %v2498
        %v2517 = vunpack.c.l.b16 %v2478
        %v2518 = vunpack.c.l.b16 %v2479
        %v2519 = vunpack.c.l.b16 %v2480
        %v2520 = vunpack.c.l.b16 %v2481
        %v2521 = vunpack.c.l.b16 %v2482
        %v2522 = vunpack.c.l.b16 %v2483
        %v2523 = vunpack.c.l.b16 %v2484
        %v2524 = vunpack.c.l.b16 %v2485
        %v2525 = vunpack.c.l.b16 %v2486
        %v2526 = vunpack.c.l.b16 %v2487
        %v2527 = vunpack.c.l.b16 %v2488
        %v2528 = vunpack.c.l.b16 %v2489
        %v2529 = vunpack.c.l.b16 %v2490
        %v2530 = vunpack.c.l.b16 %v2491
        %v2531 = vunpack.c.l.b16 %v2492
        %v2532 = vunpack.c.l.b16 %v2493
        %v2533 = vpack.c.b16 %v2518, %v2517
        %v2534 = vpack.c.b16 %v2520, %v2519
        %v2535 = vpack.c.b16 %v2522, %v2521
        %v2536 = vpack.c.b16 %v2524, %v2523
        %v2537 = vpack.c.b16 %v2526, %v2525
        %v2538 = vpack.c.b16 %v2528, %v2527
        %v2539 = vpack.c.b16 %v2530, %v2529
        %v2540 = vpack.c.b16 %v2532, %v2531
        %2549 = vmatprep.subr.bf16.mxu0 0
        %2550 = vmatpush1.bf16.msra.mxu0 %v2533
        %2551 = vmatprep.subr.bf16.mxu0 0
        %2552 = vmatpush1.bf16.msra.mxu0 %v2534
        %2553 = vmatprep.subr.bf16.mxu0 0
        %2554 = vmatpush1.bf16.msra.mxu0 %v2535
        %2555 = vmatprep.subr.bf16.mxu0 0
        %2556 = vmatpush1.bf16.msra.mxu0 %v2536
        %2557 = vmatprep.subr.bf16.mxu0 0
        %2558 = vmatpush1.bf16.msra.mxu0 %v2537
        %2559 = vmatprep.subr.bf16.mxu0 0
        %2560 = vmatpush1.bf16.msra.mxu0 %v2538
        %2561 = vmatprep.subr.bf16.mxu0 0
        %2562 = vmatpush1.bf16.msra.mxu0 %v2539
        %2563 = vmatprep.subr.bf16.mxu0 0
        %2564 = vmatpush1.bf16.msra.mxu0 %v2540
        %2565 = vmatprep.subr.bf16.mxu0 0
        %2566 = vmatpush1.bf16.msra.mxu0 0
        %2567 = vmatprep.subr.bf16.mxu0 0
        %2568 = vmatpush1.bf16.msra.mxu0 0
        %2569 = vmatprep.subr.bf16.mxu0 0
        %2570 = vmatpush1.bf16.msra.mxu0 0
        %2571 = vmatprep.subr.bf16.mxu0 0
        %2572 = vmatpush1.bf16.msra.mxu0 0
        %2573 = vmatprep.subr.bf16.mxu0 0
        %2574 = vmatpush1.bf16.msra.mxu0 0
        %2575 = vmatprep.subr.bf16.mxu0 0
        %2576 = vmatpush1.bf16.msra.mxu0 0
        %2577 = vmatprep.subr.bf16.mxu0 0
        %2578 = vmatpush1.bf16.msra.mxu0 0
        %2579 = vmatprep.subr.bf16.mxu0 0
        %2580 = vmatpush1.bf16.msra.mxu0 0
        %2581 = vmatprep.mubr.bf16.mxu0 0
        %2582 = vmatmul.mubr.bf16.gmra.mrb[0].mxu0 %v2477
        %v2583 = vpop.f32.mrb[0].mxu0
        %v2584 = vadd.f32 %v2499, %v2583
        %v2585 = vpop.f32.mrb[0].mxu0
        %v2586 = vpop.f32.mrb[0].mxu0
        %v2587 = vpop.f32.mrb[0].mxu0
        %2588 = vdwg.mxu0
        %2589 = vst [vmem:[%s546] sm:$0xff] %v2584
        %2590 = vst [vmem:[%s553] sm:$0xff] %v2207
        %s2591 = sand.u32 %s372, 1
        %s2592 = scalar_lea.sflag [#allocation3], %s2591
        %s2593 = sand.u32 %s372, 1
        %s2594 = smul.addr %s2593, 8
        %s2595 = scalar_lea.vmem [#allocation2], %s2594
        %s2596 = sand.u32 %s398, 1
        %s2597 = scalar_lea.sflag [#allocation5], %s2596
        %s2598 = sand.u32 %s398, 1
        %s2599 = smul.addr %s2598, 8
        %s2600 = scalar_lea.vmem [#allocation4], %s2599
        // Predicated region
        $region81: #{decoder_forward.1} parent=79 // pred_check
          %p2601 = pneg %p382
        $region82: #{decoder_forward.1} parent=79 // pred_check_branch
          %2603 = sbr.rel (%p2601) target = $region84
        $region83: #{decoder_forward.1} parent=79 // pred_region
          %s2605 = ssub.s32 128, 128
          %2606 = vsyncadd %s2592, %s2605
          %s2607 = smul.addr %s34, 128
          %s2608 = scalar_lea.hbm %s15, %s2607
          %s2610 = sshll.u32 %s2595, 4
          %s2611 = int_to_ptr.vmem [resolvable:$true] %s2610
          %2613 = dma.vmem_to_hbm [thread:$0]  %s2611, 128, %s2608, %s2592
        $region84: #{decoder_forward.1} parent=79 // pred_fallthru
          _
        // Predicated region
        $region85: #{decoder_forward.1} parent=79 // pred_check
          %p2614 = pneg %p408
        $region86: #{decoder_forward.1} parent=79 // pred_check_branch
          %2616 = sbr.rel (%p2614) target = $region88
        $region87: #{decoder_forward.1} parent=79 // pred_region
          %s2618 = ssub.s32 128, 128
          %2619 = vsyncadd %s2597, %s2618
          %s2620 = smul.addr %s34, 128
          %s2621 = scalar_lea.hbm %s16, %s2620
          %s2623 = sshll.u32 %s2600, 4
          %s2624 = int_to_ptr.vmem [resolvable:$true] %s2623
          %2626 = dma.vmem_to_hbm [thread:$0]  %s2624, 128, %s2621, %s2597
        $region88: #{decoder_forward.1} parent=79 // pred_fallthru
          _
      $region80: #{decoder_forward.1} parent=5 // pred_fallthru
        _
      %p2627 = scmp.le.s32.totalorder 2, %s29
      // Predicated region
      $region89: #{decoder_forward.1} parent=5 // pred_check
        %p2628 = pneg %p2627
      $region90: #{decoder_forward.1} parent=5 // pred_check_branch
        %2630 = sbr.rel (%p2628) target = $region92
      $region91: #{decoder_forward.1} parent=5 // pred_region
        %s2631 = ssub.s32 %s29, 2
        // Predicated region
        $region93: #{decoder_forward.1} parent=91 // pred_check
          %p2632 = pneg %p388
        $region94: #{decoder_forward.1} parent=91 // pred_check_branch
          %2634 = sbr.rel (%p2632) target = $region96
        $region95: #{decoder_forward.1} parent=91 // pred_region
          %s2635 = sand.u32 %s373, 1
          %s2636 = scalar_lea.sflag [#allocation3], %s2635
          %s2637 = sand.u32 %s373, 1
          %s2638 = smul.addr %s2637, 8
          %s2639 = scalar_lea.vmem [#allocation2], %s2638
          %2640 = dma.done %s2636, 128
        $region96: #{decoder_forward.1} parent=91 // pred_fallthru
          _
        // Predicated region
        $region97: #{decoder_forward.1} parent=91 // pred_check
          %p2641 = pneg %p414
        $region98: #{decoder_forward.1} parent=91 // pred_check_branch
          %2643 = sbr.rel (%p2641) target = $region100
        $region99: #{decoder_forward.1} parent=91 // pred_region
          %s2644 = sand.u32 %s399, 1
          %s2645 = scalar_lea.sflag [#allocation5], %s2644
          %s2646 = sand.u32 %s399, 1
          %s2647 = smul.addr %s2646, 8
          %s2648 = scalar_lea.vmem [#allocation4], %s2647
          %2649 = dma.done %s2645, 128
        $region100: #{decoder_forward.1} parent=91 // pred_fallthru
          _
      $region92: #{decoder_forward.1} parent=5 // pred_fallthru
        _
    $region6: #{decoder_forward.1} parent=1 // loop_footer
      %s33 = sadd.s32 1, %s29
    $region7: #{decoder_forward.1} parent=1 // loop_footer_branch
      %28 = sbr.rel target = $region3
    $region8: #{decoder_forward.1} parent=1 // loop_exit
      _
    %2650 = vsyncpa [#allocation3], 1
    %s2651 = scalar_lea.sflag [#allocation3], 1
    %2652 = vsyncpa %s2651, 1
    %2653 = vsyncpa [#allocation5], 1
    %s2654 = scalar_lea.sflag [#allocation5], 1
    %2655 = vsyncpa %s2654, 1

</llo_original>
